<compile_context>
chip_gen: v6e
topology: v6e:2x2x1
jax: 0.10.0
libtpu: 0.0.40
codegen_flags: <defaults>
</compile_context>

<pallas_src>
import functools
import math

import numpy as np
import jax
import jax.numpy as jnp
from jax import lax
from jax.experimental import pallas as pl
from jax.experimental.pallas import tpu as pltpu


def _round_up(x, m):
    return (x + m - 1) // m * m


# ----------------------------------------------------------------------------
# Parameter construction (deterministic, mirrors init_kernel in PyTorch).
# Host-side numpy glue; the heavy math lives in the Pallas kernel below.
# ----------------------------------------------------------------------------
def init_kernel_np(frame_len, frame_hop, num_fft=None, window="sqrt_hann"):
    if window != "sqrt_hann":
        raise RuntimeError("Only sqrt_hann window supported")
    fft_size = 2 ** math.ceil(math.log2(frame_len)) if not num_fft else num_fft
    # torch.hann_window(N) is periodic: 0.5*(1 - cos(2*pi*n/N)); then ** 0.5
    n = np.arange(frame_len, dtype=np.float64)
    win = np.sqrt(0.5 * (1.0 - np.cos(2.0 * np.pi * n / frame_len)))
    S_ = 0.5 * (fft_size * fft_size / frame_hop) ** 0.5
    w = np.fft.rfft(np.eye(fft_size) / S_, axis=-1)           # (fft_size, F) complex
    kernel = np.stack([w.real, w.imag], axis=-1)              # (fft_size, F, 2)
    kernel = np.transpose(kernel, (2, 1, 0)) * win            # (2, F, fft_size) * window
    kernel = kernel.reshape(fft_size + 2, 1, frame_len)       # (2F, 1, L)
    return kernel.astype(np.float32)


# ----------------------------------------------------------------------------
# Pallas kernel: mask/phase -> frames (one fused MXU dot) -> value-level OLA.
# ----------------------------------------------------------------------------
def _istft_kernel(m_ref, p_ref, krhs_ref, out_ref, *, F, Fp, T, hop, R,
                  n_rows, pack_width):
    # Blocks: m_ref/p_ref = (1, F, T) in their native dtype/layout,
    #         krhs_ref    = (6*Fp, L) bf16 fused [K_hi; K_lo; K_hi] constant,
    #         out_ref     = (1, n_rows, hop)            when pack_width is None
    #                       (1, n_rows*hop//W, W=128)   when pack_width == W.
    f32 = jnp.float32
    m = m_ref[0].astype(f32)                         # (F, T)  in-kernel cast (#8)
    p = p_ref[0].astype(f32)
    r = m * jnp.cos(p)                               # VPU/EUP; see v5e TODO above
    i = m * jnp.sin(p)

    # (#2) 8-aligned halves: pad each F-half to Fp rows so both the [r; i] stack and
    # the [c_hi; c_hi; c_lo] stack below are pure vreg stacking (16-aligned for bf16).
    zpad = jnp.zeros((Fp - F, T), f32)
    c = jnp.concatenate([r, zpad, i, zpad], axis=0)  # (2*Fp, T) f32

    # (#1) bf16x3 split ("HIGH"-style precision, lo*lo term dropped) fused into a
    # single dot along the contraction axis; f32 accumulation on the MXU.
    c_hi = c.astype(jnp.bfloat16)
    c_lo = (c - c_hi.astype(f32)).astype(jnp.bfloat16)
    lhs = jnp.concatenate([c_hi, c_hi, c_lo], axis=0)          # (6*Fp, T) bf16
    frames = lax.dot_general(
        lhs, krhs_ref[...],
        (((0,), (0,)), ((), ())),                              # contract the 6*Fp axis
        preferred_element_type=f32)                            # (T, L) f32

    # (#3) Value-level overlap-add (L = R*hop): segment u of every frame is shifted
    # down u rows via a zero-row concat and summed on the VPU -> no RMW passes on
    # out_ref and a single store at the end.
    ola = None
    for u in range(R):
        seg = frames[:, u * hop:(u + 1) * hop]                 # (T, hop) static slice
        pieces = []
        if u:
            pieces.append(jnp.zeros((u, hop), f32))
        pieces.append(seg)
        tail = n_rows - T - u
        if tail:
            pieces.append(jnp.zeros((tail, hop), f32))
        shifted = pieces[0] if len(pieces) == 1 else jnp.concatenate(pieces, axis=0)
        ola = shifted if ola is None else ola + shifted        # (n_rows, hop)

    if pack_width is None:
        out_ref[0] = ola                                       # plain rows store
    else:
        # (#4) Lane-dense store: merge P = pack_width//hop consecutive hop-rows into
        # one 128-lane row so the store path uses unmasked full-lane vst.
        out_ref[0] = jnp.reshape(ola, (n_rows * hop // pack_width, pack_width))


# ----------------------------------------------------------------------------
# Module-like wrapper mirroring the PyTorch iSTFT forward().
# ----------------------------------------------------------------------------
class ISTFT:
    def __init__(self, frame_len, frame_hop, num_fft=None, window="sqrt_hann"):
        K = init_kernel_np(frame_len, frame_hop, num_fft=num_fft, window=window)
        # Host-side NaN check ONCE on the constant kernel (doing it per forward call
        # forces a device->host sync on every dispatch).
        num_nan = int(np.sum(np.isnan(K)))
        if num_nan:
            raise RuntimeError("detect nan in STFT kernels: {:d}".format(num_nan))

        C, _, L = K.shape
        self.frame_hop = int(frame_hop)
        self.L = int(L)
        self.F = C // 2
        self.Fp = _round_up(self.F, 8)                         # aligned half height (#2)
        if L % self.frame_hop != 0:
            # TODO(synk): non-divisible hop needs a dynamic in-kernel overlap-add
            # to match general conv_transpose1d; not implemented.
            raise NotImplementedError("frame_len must be a multiple of frame_hop")
        self.R = L // self.frame_hop

        # (#1 + #2) Fused bf16x3 RHS built once: [K_hi; K_lo; K_hi], each F-half
        # zero-padded to Fp rows to line up with the in-kernel [c_hi; c_hi; c_lo].
        K2 = K.reshape(C, L).astype(np.float32)
        Kp = np.zeros((2 * self.Fp, L), np.float32)
        Kp[0:self.F] = K2[0:self.F]
        Kp[self.Fp:self.Fp + self.F] = K2[self.F:]
        Kp_j = jnp.asarray(Kp)
        K_hi = Kp_j.astype(jnp.bfloat16)
        K_lo = (Kp_j - K_hi.astype(jnp.float32)).astype(jnp.bfloat16)
        self._K_rhs = jnp.concatenate([K_hi, K_lo, K_hi], axis=0)   # (6*Fp, L) bf16

        # (#4) Lane packing factor for the output store.
        if self.frame_hop < 128 and 128 % self.frame_hop == 0:
            self._P = 128 // self.frame_hop
        else:
            self._P = 1   # hop already a multiple of 128 is lane-dense as-is;
                          # TODO(synk): other hops keep a masked-lane store path.
        self._pack_ok = None    # tri-state capability probe cache (None = unprobed)
        self._calls = {}        # cache of built pallas_call callables

    # ---- pallas_call builders -------------------------------------------------
    def _build_call(self, N, T, pack):
        F, Fp, hop, R, L = self.F, self.Fp, self.frame_hop, self.R, self.L
        n_blk = T + R - 1
        if pack:
            W = self._P * hop                                  # = 128
            A = -(-n_blk // self._P)
            n_rows = A * self._P
            out_rows, out_w, pack_width = A, W, W
        else:
            n_rows, out_rows, out_w, pack_width = n_blk, n_blk, hop, None

        kern = functools.partial(_istft_kernel, F=F, Fp=Fp, T=T, hop=hop, R=R,
                                 n_rows=n_rows, pack_width=pack_width)
        D3 = self._K_rhs.shape[0]
        return pl.pallas_call(
            kern,
            out_shape=jax.ShapeDtypeStruct((N, out_rows, out_w), jnp.float32),
            grid=(N,),
            in_specs=[
                pl.BlockSpec((1, F, T), lambda n: (n, 0, 0)),
                pl.BlockSpec((1, F, T), lambda n: (n, 0, 0)),
                pl.BlockSpec((D3, L), lambda n: (0, 0)),
            ],
            out_specs=pl.BlockSpec((1, out_rows, out_w), lambda n: (n, 0, 0)),
            # Batch axis is fully independent -> "parallel" (sharded across both
            # TensorCores on v7x).  See T-tiling TODO in the header for #5-#7.
            compiler_params=pltpu.CompilerParams(dimension_semantics=("parallel",)),
        )

    def _run(self, m, p, pack):
        N, F, T = m.shape
        key = (N, T, str(m.dtype), str(p.dtype), bool(pack))
        call = self._calls.get(key)
        if call is None:
            call = self._build_call(N, T, pack)
            self._calls[key] = call
        out = call(m, p, self._K_rhs)
        L_out = (T - 1) * self.frame_hop + self.L
        s = out.reshape(N, 1, -1)                              # contiguous -> free
        if s.shape[-1] != L_out:
            # Packed path with odd n_blk: trim the trailing (<128-sample) padding.
            s = s[:, :, :L_out]
        return s

    # ---- forward ---------------------------------------------------------------
    def __call__(self, m, p, squeeze=False):
        if p.ndim != m.ndim or p.ndim not in (2, 3):
            raise RuntimeError("Expect 2D/3D tensor, but got {:d}D".format(p.ndim))
        if p.ndim == 2:
            m = m[None]
            p = p[None]
        if m.shape[1] != self.F:
            raise RuntimeError("kernel / input channel mismatch")

        want_pack = self._P > 1 and self._pack_ok is not False
        if want_pack:
            try:
                s = self._run(m, p, pack=True)
                if self._pack_ok is None:
                    # One-time capability probe: the lane-dense path relies on an
                    # in-kernel (rows, hop) -> (rows/P, 128) relayout whose Mosaic
                    # support varies across TPU generations; validate it against the
                    # plain rows layout once and cache the decision.
                    s_rows = self._run(m, p, pack=False)
                    ok = bool(jnp.allclose(s, s_rows, rtol=1e-6, atol=1e-6))
                    self._pack_ok = ok
                    if not ok:
                        s = s_rows
            except Exception:
                self._pack_ok = False
                s = self._run(m, p, pack=False)
        else:
            s = self._run(m, p, pack=False)

        if squeeze:
            s = jnp.squeeze(s)
        return s


# ----------------------------------------------------------------------------
# Pure-numpy reference (conv_transpose1d semantics) for validation.
# ----------------------------------------------------------------------------
def istft_ref(m, p, K, hop):
    N, F, T = m.shape
    C, _, L = K.shape
    r = m * np.cos(p)
    i = m * np.sin(p)
    c = np.concatenate([r, i], axis=1)                         # (N, 2F, T)
    K2 = K.reshape(C, L)
    L_out = (T - 1) * hop + L
    out = np.zeros((N, 1, L_out), dtype=np.float64)
    for n in range(N):
        frames = c[n].T @ K2                                   # (T, L)
        for t in range(T):
            out[n, 0, t * hop:t * hop + L] += frames[t]
    return out.astype(np.float32)


if __name__ == "__main__":
    frame_len, frame_hop = 128, 64
    N, T = 2, 8
    F = frame_len // 2 + 1                                     # 65

    istft = ISTFT(frame_len, frame_hop)

    key = jax.random.PRNGKey(0)
    km, kp = jax.random.split(key)
    m = jax.random.uniform(km, (N, F, T), dtype=jnp.float32)                    # magnitude
    p = jax.random.uniform(kp, (N, F, T), dtype=jnp.float32,
                           minval=-math.pi, maxval=math.pi)                     # phase

    s = istft(m, p)
    s = jax.block_until_ready(s)

    K_np = init_kernel_np(frame_len, frame_hop)                # (130, 1, 128)
    s_ref = istft_ref(np.asarray(m), np.asarray(p), K_np, frame_hop)
    assert s.shape == s_ref.shape == (N, 1, (T - 1) * frame_hop + frame_len)
    # Relative-error style check kept in CI per review (bf16x3 error scales with |m|*|K|).
    np.testing.assert_allclose(np.asarray(s), s_ref, rtol=1e-4, atol=1e-4)

    print("KERNEL_OK")
</pallas_src>

<mosaic_0001>
module attributes {stable_mosaic.version = 11 : i64} {
  func.func @_istft_kernel(%arg0: i32, %arg1: memref<1x65x8xf32, #tpu.memory_space<vmem>>, %arg2: memref<1x65x8xf32, #tpu.memory_space<vmem>>, %arg3: memref<432x128xbf16, #tpu.memory_space<vmem>>, %arg4: memref<1x5x128xf32, #tpu.memory_space<vmem>>) attributes {dimension_semantics = [#tpu.dimension_semantics<parallel>], iteration_bounds = array<i64: 2>, scalar_prefetch = 0 : i64, scratch_operands = 0 : i64, tpu.core_type = #tpu.core_type<tc>, window_params = [{transform_indices = @transform_0, window_bounds = array<i64: 1, 65, 8>}, {transform_indices = @transform_1, window_bounds = array<i64: 1, 65, 8>}, {pipeline_mode = #tpu.pipeline_mode<synchronous>, transform_indices = @transform_2, window_bounds = array<i64: 432, 128>}, {transform_indices = @transform_3, window_bounds = array<i64: 1, 5, 128>}]} {
    %c0 = arith.constant 0 : index
    %c0_0 = arith.constant 0 : index
    %c0_1 = arith.constant 0 : index
    %0 = vector.load %arg1[%c0, %c0_0, %c0_1] : memref<1x65x8xf32, #tpu.memory_space<vmem>>, vector<1x65x8xf32>
    %1 = vector.shape_cast %0 : vector<1x65x8xf32> to vector<65x8xf32>
    %c0_2 = arith.constant 0 : index
    %c0_3 = arith.constant 0 : index
    %c0_4 = arith.constant 0 : index
    %2 = vector.load %arg2[%c0_2, %c0_3, %c0_4] : memref<1x65x8xf32, #tpu.memory_space<vmem>>, vector<1x65x8xf32>
    %3 = vector.shape_cast %2 : vector<1x65x8xf32> to vector<65x8xf32>
    %4 = math.cos %3 : vector<65x8xf32>
    %5 = arith.mulf %1, %4 : vector<65x8xf32>
    %6 = math.sin %3 : vector<65x8xf32>
    %7 = arith.mulf %1, %6 : vector<65x8xf32>
    %cst = arith.constant 0.000000e+00 : f32
    %8 = vector.broadcast %cst : f32 to vector<7x8xf32>
    %9 = tpu.concatenate %5, %8, %7, %8 in 0 : vector<65x8xf32>, vector<7x8xf32>, vector<65x8xf32>, vector<7x8xf32> -> vector<144x8xf32>
    %10 = arith.truncf %9 : vector<144x8xf32> to vector<144x8xbf16>
    %11 = arith.extf %10 : vector<144x8xbf16> to vector<144x8xf32>
    %12 = arith.subf %9, %11 : vector<144x8xf32>
    %13 = arith.truncf %12 : vector<144x8xf32> to vector<144x8xbf16>
    %14 = tpu.concatenate %10, %10, %13 in 0 : vector<144x8xbf16>, vector<144x8xbf16>, vector<144x8xbf16> -> vector<432x8xbf16>
    %c0_5 = arith.constant 0 : index
    %c0_6 = arith.constant 0 : index
    %15 = vector.load %arg3[%c0_5, %c0_6] : memref<432x128xbf16, #tpu.memory_space<vmem>>, vector<432x128xbf16>
    %cst_7 = arith.constant dense<0.000000e+00> : vector<8x128xf32>
    %16 = tpu.matmul %14, %15, %cst_7 {dimension_numbers = #tpu.dot_dimension_numbers<[0], [0], [1], [1], [0, 1, 1, 1], [], []>} : vector<432x8xbf16>, vector<432x128xbf16>, vector<8x128xf32> -> vector<8x128xf32>
    %17 = vector.extract_strided_slice %16 {offsets = [0, 0], sizes = [8, 64], strides = [1, 1]} : vector<8x128xf32> to vector<8x64xf32>
    %cst_8 = arith.constant 0.000000e+00 : f32
    %18 = vector.broadcast %cst_8 : f32 to vector<2x64xf32>
    %19 = tpu.concatenate %17, %18 in 0 : vector<8x64xf32>, vector<2x64xf32> -> vector<10x64xf32>
    %20 = vector.extract_strided_slice %16 {offsets = [0, 64], sizes = [8, 64], strides = [1, 1]} : vector<8x128xf32> to vector<8x64xf32>
    %cst_9 = arith.constant 0.000000e+00 : f32
    %21 = vector.broadcast %cst_9 : f32 to vector<1x64xf32>
    %cst_10 = arith.constant 0.000000e+00 : f32
    %22 = vector.broadcast %cst_10 : f32 to vector<1x64xf32>
    %23 = tpu.concatenate %21, %20, %22 in 0 : vector<1x64xf32>, vector<8x64xf32>, vector<1x64xf32> -> vector<10x64xf32>
    %24 = arith.addf %19, %23 : vector<10x64xf32>
    %25 = vector.shape_cast %24 : vector<10x64xf32> to vector<5x128xf32>
    %c0_11 = arith.constant 0 : index
    %c0_12 = arith.constant 0 : index
    %c0_13 = arith.constant 0 : index
    %26 = vector.load %arg4[%c0_11, %c0_12, %c0_13] : memref<1x5x128xf32, #tpu.memory_space<vmem>>, vector<1x5x128xf32>
    %27 = vector.shape_cast %26 : vector<1x5x128xf32> to vector<5x128xf32>
    %28 = vector.shape_cast %25 : vector<5x128xf32> to vector<1x5x128xf32>
    tpu.vector_store %arg4[%c0_11, %c0_12, %c0_13], %28 {strides = array<i32>} : memref<1x5x128xf32, #tpu.memory_space<vmem>>, vector<1x5x128xf32>,
    return
  }
  func.func @transform_0(%arg0: i32) -> (i32, i32, i32) {
    %c0_i32 = arith.constant 0 : i32
    %c0_i32_0 = arith.constant 0 : i32
    %c0_i32_1 = arith.constant 0 : i32
    return %arg0, %c0_i32, %c0_i32_0 : i32, i32, i32
  }
  func.func @transform_1(%arg0: i32) -> (i32, i32, i32) {
    %c0_i32 = arith.constant 0 : i32
    %c0_i32_0 = arith.constant 0 : i32
    %c0_i32_1 = arith.constant 0 : i32
    return %arg0, %c0_i32, %c0_i32_0 : i32, i32, i32
  }
  func.func @transform_2(%arg0: i32) -> (i32, i32) {
    %c0_i32 = arith.constant 0 : i32
    %c0_i32_0 = arith.constant 0 : i32
    %c0_i32_1 = arith.constant 0 : i32
    return %c0_i32, %c0_i32_0 : i32, i32
  }
  func.func @transform_3(%arg0: i32) -> (i32, i32, i32) {
    %c0_i32 = arith.constant 0 : i32
    %c0_i32_0 = arith.constant 0 : i32
    %c0_i32_1 = arith.constant 0 : i32
    return %arg0, %c0_i32, %c0_i32_0 : i32, i32, i32
  }
}

module attributes {stable_mosaic.version = 11 : i64} {
  func.func @_istft_kernel(%arg0: i32, %arg1: memref<1x65x8xf32, #tpu.memory_space<vmem>>, %arg2: memref<1x65x8xf32, #tpu.memory_space<vmem>>, %arg3: memref<432x128xbf16, #tpu.memory_space<vmem>>, %arg4: memref<1x9x64xf32, #tpu.memory_space<vmem>>) attributes {dimension_semantics = [#tpu.dimension_semantics<parallel>], iteration_bounds = array<i64: 2>, scalar_prefetch = 0 : i64, scratch_operands = 0 : i64, tpu.core_type = #tpu.core_type<tc>, window_params = [{transform_indices = @transform_0, window_bounds = array<i64: 1, 65, 8>}, {transform_indices = @transform_1, window_bounds = array<i64: 1, 65, 8>}, {pipeline_mode = #tpu.pipeline_mode<synchronous>, transform_indices = @transform_2, window_bounds = array<i64: 432, 128>}, {transform_indices = @transform_3, window_bounds = array<i64: 1, 9, 64>}]} {
    %c0 = arith.constant 0 : index
    %c0_0 = arith.constant 0 : index
    %c0_1 = arith.constant 0 : index
    %0 = vector.load %arg1[%c0, %c0_0, %c0_1] : memref<1x65x8xf32, #tpu.memory_space<vmem>>, vector<1x65x8xf32>
    %1 = vector.shape_cast %0 : vector<1x65x8xf32> to vector<65x8xf32>
    %c0_2 = arith.constant 0 : index
    %c0_3 = arith.constant 0 : index
    %c0_4 = arith.constant 0 : index
    %2 = vector.load %arg2[%c0_2, %c0_3, %c0_4] : memref<1x65x8xf32, #tpu.memory_space<vmem>>, vector<1x65x8xf32>
    %3 = vector.shape_cast %2 : vector<1x65x8xf32> to vector<65x8xf32>
    %4 = math.cos %3 : vector<65x8xf32>
    %5 = arith.mulf %1, %4 : vector<65x8xf32>
    %6 = math.sin %3 : vector<65x8xf32>
    %7 = arith.mulf %1, %6 : vector<65x8xf32>
    %cst = arith.constant 0.000000e+00 : f32
    %8 = vector.broadcast %cst : f32 to vector<7x8xf32>
    %9 = tpu.concatenate %5, %8, %7, %8 in 0 : vector<65x8xf32>, vector<7x8xf32>, vector<65x8xf32>, vector<7x8xf32> -> vector<144x8xf32>
    %10 = arith.truncf %9 : vector<144x8xf32> to vector<144x8xbf16>
    %11 = arith.extf %10 : vector<144x8xbf16> to vector<144x8xf32>
    %12 = arith.subf %9, %11 : vector<144x8xf32>
    %13 = arith.truncf %12 : vector<144x8xf32> to vector<144x8xbf16>
    %14 = tpu.concatenate %10, %10, %13 in 0 : vector<144x8xbf16>, vector<144x8xbf16>, vector<144x8xbf16> -> vector<432x8xbf16>
    %c0_5 = arith.constant 0 : index
    %c0_6 = arith.constant 0 : index
    %15 = vector.load %arg3[%c0_5, %c0_6] : memref<432x128xbf16, #tpu.memory_space<vmem>>, vector<432x128xbf16>
    %cst_7 = arith.constant dense<0.000000e+00> : vector<8x128xf32>
    %16 = tpu.matmul %14, %15, %cst_7 {dimension_numbers = #tpu.dot_dimension_numbers<[0], [0], [1], [1], [0, 1, 1, 1], [], []>} : vector<432x8xbf16>, vector<432x128xbf16>, vector<8x128xf32> -> vector<8x128xf32>
    %17 = vector.extract_strided_slice %16 {offsets = [0, 0], sizes = [8, 64], strides = [1, 1]} : vector<8x128xf32> to vector<8x64xf32>
    %cst_8 = arith.constant 0.000000e+00 : f32
    %18 = vector.broadcast %cst_8 : f32 to vector<1x64xf32>
    %19 = tpu.concatenate %17, %18 in 0 : vector<8x64xf32>, vector<1x64xf32> -> vector<9x64xf32>
    %20 = vector.extract_strided_slice %16 {offsets = [0, 64], sizes = [8, 64], strides = [1, 1]} : vector<8x128xf32> to vector<8x64xf32>
    %cst_9 = arith.constant 0.000000e+00 : f32
    %21 = vector.broadcast %cst_9 : f32 to vector<1x64xf32>
    %22 = tpu.concatenate %21, %20 in 0 : vector<1x64xf32>, vector<8x64xf32> -> vector<9x64xf32>
    %23 = arith.addf %19, %22 : vector<9x64xf32>
    %c0_10 = arith.constant 0 : index
    %c0_11 = arith.constant 0 : index
    %c0_12 = arith.constant 0 : index
    %24 = vector.load %arg4[%c0_10, %c0_11, %c0_12] : memref<1x9x64xf32, #tpu.memory_space<vmem>>, vector<1x9x64xf32>
    %25 = vector.shape_cast %24 : vector<1x9x64xf32> to vector<9x64xf32>
    %26 = vector.shape_cast %23 : vector<9x64xf32> to vector<1x9x64xf32>
    tpu.vector_store %arg4[%c0_10, %c0_11, %c0_12], %26 {strides = array<i32>} : memref<1x9x64xf32, #tpu.memory_space<vmem>>, vector<1x9x64xf32>,
    return
  }
  func.func @transform_0(%arg0: i32) -> (i32, i32, i32) {
    %c0_i32 = arith.constant 0 : i32
    %c0_i32_0 = arith.constant 0 : i32
    %c0_i32_1 = arith.constant 0 : i32
    return %arg0, %c0_i32, %c0_i32_0 : i32, i32, i32
  }
  func.func @transform_1(%arg0: i32) -> (i32, i32, i32) {
    %c0_i32 = arith.constant 0 : i32
    %c0_i32_0 = arith.constant 0 : i32
    %c0_i32_1 = arith.constant 0 : i32
    return %arg0, %c0_i32, %c0_i32_0 : i32, i32, i32
  }
  func.func @transform_2(%arg0: i32) -> (i32, i32) {
    %c0_i32 = arith.constant 0 : i32
    %c0_i32_0 = arith.constant 0 : i32
    %c0_i32_1 = arith.constant 0 : i32
    return %c0_i32, %c0_i32_0 : i32, i32
  }
  func.func @transform_3(%arg0: i32) -> (i32, i32, i32) {
    %c0_i32 = arith.constant 0 : i32
    %c0_i32_0 = arith.constant 0 : i32
    %c0_i32_1 = arith.constant 0 : i32
    return %arg0, %c0_i32, %c0_i32_0 : i32, i32, i32
  }
}

</mosaic_0001>

<llo_original>
// kernel: tpu_custom_call.1
$region0: #{tpu_custom_call.1}
  #allocation0 [shape = 'u32[]', space=smem, size = 0x4, offset = 0x4, fixed_abs, tag = 'smem constant byte address 0x4 - core index']
  #allocation1 [shape = 'u32[144,128]{1,0:T(1,128)}', space=vmem, size = 0x12000, scoped, tag = 'internal scratch']
  %s0 = inlined_call_operand.vmem [shape: f32[2,65,8], index: 0, kind: input, shape index: {}]
  %s1 = inlined_call_operand.vmem [shape: f32[2,65,8], index: 1, kind: input, shape index: {}]
  %s2 = inlined_call_operand.vmem [shape: bf16[432,128], index: 2, kind: input, shape index: {}]
  %s3 = inlined_call_operand.vmem [shape: f32[2,9,64], index: 3, kind: output, shape index: {}]
  %s4 = sld [smem:[#allocation0]]
  $region45: #{tpu_custom_call.1} parent=0
    _
  %s6 = ssub.s32 1, %s4
  %s7 = scalar_select 0, %s6, %s4
  loop: start=0, step=1, limit=4
  $region2: #{tpu_custom_call.1} parent=0 // loop_pre_header
    _
  $region3: #{tpu_custom_call.1} parent=0 // loop_header
    %s9 = sphi 0, %s13
    %p10 = scmp.ge.s32.totalorder %s9, 4
    %s19 = sphi 0, %s21
    %s22 = sphi 0, %s19
    %s23 = sphi 0, %s22
    %s39 = sphi 0, %s23
    %s45 = sphi 0, %s47
    %s48 = sphi 0, %s45
    %s49 = sphi 0, %s48
    %s65 = sphi 0, %s49
    %s69 = sphi 0, %s69
    %s71 = sphi 0, %s69
    %s72 = sphi 0, %s71
    %s86 = sphi 0, %s72
    %s92 = sphi 0, %s94
    %s95 = sphi 0, %s92
    %s96 = sphi 0, %s95
    %s112 = sphi 0, %s96
  $region4: #{tpu_custom_call.1} parent=0 // loop_header_branch
    %12 = sbr.rel (%p10) target = $region8
  $region5: #{tpu_custom_call.1} parent=0 // loop_body
    %s14 = ssub.s32 %s9, 1
    %s15 = ssub.s32 %s9, 2
    %s16 = sadd.s32 %s9, 1
    %s17 = ssub.s32 %s9, %s16
    %p18 = scmp.eq.s32.totalorder %s17, 0
    %s20 = sadd.s32 %s19, 1
    %s21 = scalar_select %p18, %s19, %s20
    %p24 = pneg %p18
    %p25 = scmp.eq.s32.totalorder %s9, 1
    %p26 = por %p24, %p25
    %p27 = scmp.ne.s32.totalorder %s19, %s22
    %p28 = scmp.eq.s32.totalorder %s9, 0
    %p29 = por %p27, %p28
    %p30 = scmp.ne.s32.totalorder %s19, %s22
    %p31 = scmp.eq.s32.totalorder %s14, 1
    %p32 = por %p30, %p31
    %p33 = scmp.ne.s32.totalorder %s22, %s23
    %p34 = scmp.eq.s32.totalorder %s14, 0
    %p35 = por %p33, %p34
    %p36 = scmp.ne.s32.totalorder %s22, %s23
    %p37 = scmp.eq.s32.totalorder %s15, 1
    %p38 = por %p36, %p37
    %p40 = scmp.ne.s32.totalorder %s23, %s39
    %p41 = scmp.eq.s32.totalorder %s15, 0
    %p42 = por %p40, %p41
    %s43 = ssub.s32 %s9, %s16
    %p44 = scmp.eq.s32.totalorder %s43, 0
    %s46 = sadd.s32 %s45, 1
    %s47 = scalar_select %p44, %s45, %s46
    %p50 = pneg %p44
    %p51 = scmp.eq.s32.totalorder %s9, 1
    %p52 = por %p50, %p51
    %p53 = scmp.ne.s32.totalorder %s45, %s48
    %p54 = scmp.eq.s32.totalorder %s9, 0
    %p55 = por %p53, %p54
    %p56 = scmp.ne.s32.totalorder %s45, %s48
    %p57 = scmp.eq.s32.totalorder %s14, 1
    %p58 = por %p56, %p57
    %p59 = scmp.ne.s32.totalorder %s48, %s49
    %p60 = scmp.eq.s32.totalorder %s14, 0
    %p61 = por %p59, %p60
    %p62 = scmp.ne.s32.totalorder %s48, %s49
    %p63 = scmp.eq.s32.totalorder %s15, 1
    %p64 = por %p62, %p63
    %p66 = scmp.ne.s32.totalorder %s49, %s65
    %p67 = scmp.eq.s32.totalorder %s15, 0
    %p68 = por %p66, %p67
    %s70 = sadd.s32 %s69, 1
    %p73 = scmp.eq.s32.totalorder %s9, 1
    %p74 = scmp.ne.s32.totalorder %s69, %s71
    %p75 = scmp.eq.s32.totalorder %s9, 0
    %p76 = por %p74, %p75
    %p77 = scmp.ne.s32.totalorder %s69, %s71
    %p78 = scmp.eq.s32.totalorder %s14, 1
    %p79 = por %p77, %p78
    %p80 = scmp.ne.s32.totalorder %s71, %s72
    %p81 = scmp.eq.s32.totalorder %s14, 0
    %p82 = por %p80, %p81
    %p83 = scmp.ne.s32.totalorder %s71, %s72
    %p84 = scmp.eq.s32.totalorder %s15, 1
    %p85 = por %p83, %p84
    %p87 = scmp.ne.s32.totalorder %s72, %s86
    %p88 = scmp.eq.s32.totalorder %s15, 0
    %p89 = por %p87, %p88
    %s90 = ssub.s32 %s9, %s16
    %p91 = scmp.eq.s32.totalorder %s90, 0
    %s93 = sadd.s32 %s92, 1
    %s94 = scalar_select %p91, %s92, %s93
    %p97 = pneg %p91
    %p98 = scmp.eq.s32.totalorder %s9, 1
    %p99 = por %p97, %p98
    %p100 = scmp.ne.s32.totalorder %s92, %s95
    %p101 = scmp.eq.s32.totalorder %s9, 0
    %p102 = por %p100, %p101
    %p103 = scmp.ne.s32.totalorder %s92, %s95
    %p104 = scmp.eq.s32.totalorder %s14, 1
    %p105 = por %p103, %p104
    %p106 = scmp.ne.s32.totalorder %s95, %s96
    %p107 = scmp.eq.s32.totalorder %s14, 0
    %p108 = por %p106, %p107
    %p109 = scmp.ne.s32.totalorder %s95, %s96
    %p110 = scmp.eq.s32.totalorder %s15, 1
    %p111 = por %p109, %p110
    %p113 = scmp.ne.s32.totalorder %s96, %s112
    %p114 = scmp.eq.s32.totalorder %s15, 0
    %p115 = por %p113, %p114
    %p116 = scmp.le.s32.totalorder 1, %s9
    %p117 = scmp.lt.s32.totalorder %s9, 3
    %p118 = pnand %p116, %p117
    %p119 = pneg %p118
    // Predicated region
    $region9: #{tpu_custom_call.1} parent=5 // pred_check
      _
    $region10: #{tpu_custom_call.1} parent=5 // pred_check_branch
      %121 = sbr.rel (%p118) target = $region12
    $region11: #{tpu_custom_call.1} parent=5 // pred_region
      %s122 = ssub.s32 %s9, 1
      // Predicated region
      $region13: #{tpu_custom_call.1} parent=11 // pred_check
        %p123 = pneg %p82
      $region14: #{tpu_custom_call.1} parent=11 // pred_check_branch
        %125 = sbr.rel (%p123) target = $region16
      $region15: #{tpu_custom_call.1} parent=11 // pred_region
        _
      $region16: #{tpu_custom_call.1} parent=11 // pred_fallthru
        _
    $region12: #{tpu_custom_call.1} parent=5 // pred_fallthru
      _
    %p126 = scmp.lt.s32.totalorder %s9, 2
    // Predicated region
    $region17: #{tpu_custom_call.1} parent=5 // pred_check
      %p127 = pneg %p126
    $region18: #{tpu_custom_call.1} parent=5 // pred_check_branch
      %129 = sbr.rel (%p127) target = $region20
    $region19: #{tpu_custom_call.1} parent=5 // pred_region
      // Predicated region
      $region21: #{tpu_custom_call.1} parent=19 // pred_check
        %p130 = pneg %p29
      $region22: #{tpu_custom_call.1} parent=19 // pred_check_branch
        %132 = sbr.rel (%p130) target = $region24
      $region23: #{tpu_custom_call.1} parent=19 // pred_region
        %p133 = scmp.lt.s32.totalorder %s9, 1
        %s134 = scalar_select %p133, %s9, 1
        %s135 = smul.addr %s134, 9
        %s136 = smul.addr %s135, 8
        %s137 = scalar_lea.vmem %s0, %s136
      $region24: #{tpu_custom_call.1} parent=19 // pred_fallthru
        _
      // Predicated region
      $region25: #{tpu_custom_call.1} parent=19 // pred_check
        %p138 = pneg %p55
      $region26: #{tpu_custom_call.1} parent=19 // pred_check_branch
        %140 = sbr.rel (%p138) target = $region28
      $region27: #{tpu_custom_call.1} parent=19 // pred_region
        %p141 = scmp.lt.s32.totalorder %s9, 1
        %s142 = scalar_select %p141, %s9, 1
        %s143 = smul.addr %s142, 9
        %s144 = smul.addr %s143, 8
        %s145 = scalar_lea.vmem %s1, %s144
      $region28: #{tpu_custom_call.1} parent=19 // pred_fallthru
        _
    $region20: #{tpu_custom_call.1} parent=5 // pred_fallthru
      _
    %p146 = scmp.le.s32.totalorder 1, %s9
    %p147 = scmp.lt.s32.totalorder %s9, 3
    %p148 = pnand %p146, %p147
    %p149 = pneg %p148
    // Predicated region
    $region29: #{tpu_custom_call.1} parent=5 // pred_check
      _
    $region30: #{tpu_custom_call.1} parent=5 // pred_check_branch
      %151 = sbr.rel (%p148) target = $region32
    $region31: #{tpu_custom_call.1} parent=5 // pred_region
      %s152 = ssub.s32 %s9, 1
      %p153 = scmp.lt.s32.totalorder %s14, 1
      %s154 = scalar_select %p153, %s14, 1
      %s155 = smul.addr %s154, 9
      %s156 = smul.addr %s155, 8
      %s157 = scalar_lea.vmem %s0, %s156
      %p158 = pneg %p35
      %p159 = pneg %p32
      %p160 = scmp.lt.s32.totalorder %s14, 1
      %s161 = scalar_select %p160, %s14, 1
      %s162 = smul.addr %s161, 9
      %s163 = smul.addr %s162, 8
      %s164 = scalar_lea.vmem %s1, %s163
      %p165 = pneg %p61
      %p166 = pneg %p58
      %p167 = pneg %p82
      %p168 = pneg %p79
      %p169 = pneg %p108
      %p170 = pneg %p105
      %p171 = scmp.lt.s32.totalorder %s14, 1
      %s172 = scalar_select %p171, %s14, 1
      %s173 = smul.addr %s172, 2
      %s174 = smul.addr %s173, 8
      %s175 = scalar_lea.vmem %s3, %s174
      %p176 = scmp.lt.s32.totalorder %s14, 1
      %s177 = scalar_select %p176, %s14, 1
      %s178 = smul.addr %s177, 9
      %s179 = smul.addr %s178, 8
      %s180 = scalar_lea.vmem %s0, %s179
      %p181 = scmp.lt.s32.totalorder %s14, 1
      %s182 = scalar_select %p181, %s14, 1
      %s183 = smul.addr %s182, 9
      %s184 = smul.addr %s183, 8
      %s185 = scalar_lea.vmem %s1, %s184
      %p186 = scmp.lt.s32.totalorder %s14, 1
      %s187 = scalar_select %p186, %s14, 1
      %s188 = smul.addr %s187, 2
      %s189 = smul.addr %s188, 8
      %s190 = scalar_lea.vmem %s3, %s189
      %v192 = vld [vmem:[%s180] sm:$0xff]
      %v193 = vld [vmem:[%s180 + $0x8] sm:$0xff]
      %v194 = vld [vmem:[%s180 + $0x10] sm:$0xff]
      %v195 = vld [vmem:[%s180 + $0x18] sm:$0xff]
      %v196 = vld [vmem:[%s180 + $0x20] sm:$0xff]
      %v197 = vld [vmem:[%s180 + $0x28] sm:$0xff]
      %v198 = vld [vmem:[%s180 + $0x30] sm:$0xff]
      %v199 = vld [vmem:[%s180 + $0x38] sm:$0xff]
      %v200 = vld [vmem:[%s180 + $0x40] sm:$0x1]
      %v201 = vld [vmem:[%s185] sm:$0xff]
      %v202 = vld [vmem:[%s185 + $0x8] sm:$0xff]
      %v203 = vld [vmem:[%s185 + $0x10] sm:$0xff]
      %v204 = vld [vmem:[%s185 + $0x18] sm:$0xff]
      %v205 = vld [vmem:[%s185 + $0x20] sm:$0xff]
      %v206 = vld [vmem:[%s185 + $0x28] sm:$0xff]
      %v207 = vld [vmem:[%s185 + $0x30] sm:$0xff]
      %v208 = vld [vmem:[%s185 + $0x38] sm:$0xff]
      %v209 = vld [vmem:[%s185 + $0x40] sm:$0x1]
      %v210 = vand.u32 2147483647, %v201
      %vm211 = vcmp.le.f32.partialorder %v210, 0.7853982
      %vm212 = vcmp.lt.s32.totalorder %v201, 0
      %v213 = vand.u32 %v201, 2139095040
      %v214 = vshrl.u32 %v213, 23
      %v215 = vsub.s32 %v214, 127
      %v216 = vand.u32 2147483647, %v201
      %v217 = vand.u32 %v216, 8388607
      %v218 = vor.u32 %v217, 8388608
      %v219 = vsub.s32 0, %v218
      %v220 = vadd.s32 %v215, 1
      %vm221 = vcmp.gt.s32.totalorder %v220, 0
      %v222 = vsel %vm221, %v220, 0
      %v223 = vshrl.u32 %v222, 5
      %v224 = vand.u32 %v222, 31
      %v225 = vsub.s32 32, %v224
      %v226 = vshrl.u32 683565275, %v225
      %v227 = vshll.u32 683565275, %v224
      %v228 = vshrl.u32 2475754826, %v225
      %v229 = vor.u32 %v227, %v228
      %v230 = vshll.u32 2475754826, %v224
      %v231 = vshrl.u32 2131351028, %v225
      %v232 = vor.u32 %v230, %v231
      %v233 = vshll.u32 2131351028, %v224
      %v234 = vshrl.u32 2102212464, %v225
      %v235 = vor.u32 %v233, %v234
      %v236 = vshll.u32 2102212464, %v224
      %v237 = vshrl.u32 920167782, %v225
      %v238 = vor.u32 %v236, %v237
      %v239 = vshll.u32 920167782, %v224
      %v240 = vshrl.u32 1326507024, %v225
      %v241 = vor.u32 %v239, %v240
      %vm242 = vcmp.lt.s32.totalorder %v223, 1
      %vm243 = vcmp.lt.s32.totalorder %v223, 2
      %vm244 = vcmp.lt.s32.totalorder %v223, 3
      %vm245 = vcmp.lt.s32.totalorder %v223, 4
      %v246 = vsel %vm242, %v226, %v229
      %v247 = vsel %vm245, %v235, 2102212464
      %v248 = vsel %vm244, %v232, %v247
      %v249 = vsel %vm243, %v246, %v248
      %v250 = vsel %vm242, %v229, %v232
      %v251 = vsel %vm245, %v238, 920167782
      %v252 = vsel %vm244, %v235, %v251
      %v253 = vsel %vm243, %v250, %v252
      %v254 = vsel %vm242, %v232, %v235
      %v255 = vsel %vm245, %v241, 1326507024
      %v256 = vsel %vm244, %v238, %v255
      %v257 = vsel %vm243, %v254, %v256
      %v258 = vshll.u32 %v218, 8
      %v259 = vmul.u32.u64.compose %v258, %v257
      %v260 = vextract.low.u32 %v259
      %v261 = vextract.high.u32 %v259
      %v262 = vmul.u32.u64.compose %v258, %v253
      %v263 = vextract.low.u32 %v262
      %v264 = vextract.high.u32 %v262
      %v265 = vmul.u32 %v258, %v249
      %v266 = vadd.s32 %v261, %v263
      %vm267 = vc.u32 %v261, %v263
      %v268 = vadd.s32 %v264, 1
      %v269 = vsel %vm267, %v268, %v264
      %v270 = vadd.s32 %v265, %v269
      %v271 = vadd.s32 %v270, 536870912
      %v272 = vshrl.u32 %v271, 30
      %v273 = vshll.u32 %v272, 30
      %v274 = vsub.s32 %v270, %v273
      %vm275 = vcmp.lt.s32.totalorder %v274, 0
      %v276 = vsub.s32 0, %v274
      %v277 = vsel %vm275, %v276, %v274
      %v278 = vclz %v277
      %v279 = vsub.s32 %v278, 2
      %vm280 = vcmp.gt.s32.totalorder 0, %v279
      %v281 = vsel %vm280, 0, %v279
      %v282 = vsub.s32 32, %v281
      %v283 = vshll.u32 %v274, %v281
      %v284 = vshrl.u32 %v266, %v282
      %v285 = vor.u32 %v283, %v284
      %v286 = vsub.s32 4294967266, %v281
      %v287 = vadd.s32 %v286, 127
      %v288 = vshll.u32 %v287, 23
      %v289 = vor.u32 4788187, %v288
      %v290 = vand.u32 2147483647, %v289
      %v292 = vcvt.s32.f32 %v285
      %v293 = vmul.f32 %v292, %v290
      %v294 = vxor.u32 %v293, 2147483648
      %v295 = vsel %vm212, %v294, %v293
      %v296 = vsub.s32 4, %v272
      %v297 = vsel %vm212, %v296, %v272
      %v298 = vsel %vm211, %v201, %v295
      %v299 = vsel %vm211, 0, %v297
      %v300 = vcosq.f32.pop %v298
      %v301 = vsinq.f32.pop %v298
      %vm302 = vweird.f32 %v201
      %v303 = vand.u32 %v299, 3
      %vm304 = vcmp.lt.s32.totalorder %v303, 2
      %vm305 = vcmp.eq.s32.totalorder %v303, 0
      %v306 = vxor.u32 %v301, 2147483648
      %v307 = vsel %vm305, %v300, %v306
      %vm308 = vcmp.eq.s32.totalorder %v303, 2
      %v309 = vxor.u32 %v300, 2147483648
      %v310 = vsel %vm308, %v309, %v301
      %v311 = vsel %vm304, %v307, %v310
      %v312 = vsel %vm302, nan, %v311
      %v313 = vand.u32 2147483647, %v202
      %vm314 = vcmp.le.f32.partialorder %v313, 0.7853982
      %vm315 = vcmp.lt.s32.totalorder %v202, 0
      %v316 = vand.u32 %v202, 2139095040
      %v317 = vshrl.u32 %v316, 23
      %v318 = vsub.s32 %v317, 127
      %v319 = vand.u32 2147483647, %v202
      %v320 = vand.u32 %v319, 8388607
      %v321 = vor.u32 %v320, 8388608
      %v322 = vsub.s32 0, %v321
      %v323 = vadd.s32 %v318, 1
      %vm324 = vcmp.gt.s32.totalorder %v323, 0
      %v325 = vsel %vm324, %v323, 0
      %v326 = vshrl.u32 %v325, 5
      %v327 = vand.u32 %v325, 31
      %v328 = vsub.s32 32, %v327
      %v329 = vshrl.u32 683565275, %v328
      %v330 = vshll.u32 683565275, %v327
      %v331 = vshrl.u32 2475754826, %v328
      %v332 = vor.u32 %v330, %v331
      %v333 = vshll.u32 2475754826, %v327
      %v334 = vshrl.u32 2131351028, %v328
      %v335 = vor.u32 %v333, %v334
      %v336 = vshll.u32 2131351028, %v327
      %v337 = vshrl.u32 2102212464, %v328
      %v338 = vor.u32 %v336, %v337
      %v339 = vshll.u32 2102212464, %v327
      %v340 = vshrl.u32 920167782, %v328
      %v341 = vor.u32 %v339, %v340
      %v342 = vshll.u32 920167782, %v327
      %v343 = vshrl.u32 1326507024, %v328
      %v344 = vor.u32 %v342, %v343
      %vm345 = vcmp.lt.s32.totalorder %v326, 1
      %vm346 = vcmp.lt.s32.totalorder %v326, 2
      %vm347 = vcmp.lt.s32.totalorder %v326, 3
      %vm348 = vcmp.lt.s32.totalorder %v326, 4
      %v349 = vsel %vm345, %v329, %v332
      %v350 = vsel %vm348, %v338, 2102212464
      %v351 = vsel %vm347, %v335, %v350
      %v352 = vsel %vm346, %v349, %v351
      %v353 = vsel %vm345, %v332, %v335
      %v354 = vsel %vm348, %v341, 920167782
      %v355 = vsel %vm347, %v338, %v354
      %v356 = vsel %vm346, %v353, %v355
      %v357 = vsel %vm345, %v335, %v338
      %v358 = vsel %vm348, %v344, 1326507024
      %v359 = vsel %vm347, %v341, %v358
      %v360 = vsel %vm346, %v357, %v359
      %v361 = vshll.u32 %v321, 8
      %v362 = vmul.u32.u64.compose %v361, %v360
      %v363 = vextract.low.u32 %v362
      %v364 = vextract.high.u32 %v362
      %v365 = vmul.u32.u64.compose %v361, %v356
      %v366 = vextract.low.u32 %v365
      %v367 = vextract.high.u32 %v365
      %v368 = vmul.u32 %v361, %v352
      %v369 = vadd.s32 %v364, %v366
      %vm370 = vc.u32 %v364, %v366
      %v371 = vadd.s32 %v367, 1
      %v372 = vsel %vm370, %v371, %v367
      %v373 = vadd.s32 %v368, %v372
      %v374 = vadd.s32 %v373, 536870912
      %v375 = vshrl.u32 %v374, 30
      %v376 = vshll.u32 %v375, 30
      %v377 = vsub.s32 %v373, %v376
      %vm378 = vcmp.lt.s32.totalorder %v377, 0
      %v379 = vsub.s32 0, %v377
      %v380 = vsel %vm378, %v379, %v377
      %v381 = vclz %v380
      %v382 = vsub.s32 %v381, 2
      %vm383 = vcmp.gt.s32.totalorder 0, %v382
      %v384 = vsel %vm383, 0, %v382
      %v385 = vsub.s32 32, %v384
      %v386 = vshll.u32 %v377, %v384
      %v387 = vshrl.u32 %v369, %v385
      %v388 = vor.u32 %v386, %v387
      %v389 = vsub.s32 4294967266, %v384
      %v390 = vadd.s32 %v389, 127
      %v391 = vshll.u32 %v390, 23
      %v392 = vor.u32 4788187, %v391
      %v393 = vand.u32 2147483647, %v392
      %v395 = vcvt.s32.f32 %v388
      %v396 = vmul.f32 %v395, %v393
      %v397 = vxor.u32 %v396, 2147483648
      %v398 = vsel %vm315, %v397, %v396
      %v399 = vsub.s32 4, %v375
      %v400 = vsel %vm315, %v399, %v375
      %v401 = vsel %vm314, %v202, %v398
      %v402 = vsel %vm314, 0, %v400
      %v403 = vcosq.f32.pop %v401
      %v404 = vsinq.f32.pop %v401
      %vm405 = vweird.f32 %v202
      %v406 = vand.u32 %v402, 3
      %vm407 = vcmp.lt.s32.totalorder %v406, 2
      %vm408 = vcmp.eq.s32.totalorder %v406, 0
      %v409 = vxor.u32 %v404, 2147483648
      %v410 = vsel %vm408, %v403, %v409
      %vm411 = vcmp.eq.s32.totalorder %v406, 2
      %v412 = vxor.u32 %v403, 2147483648
      %v413 = vsel %vm411, %v412, %v404
      %v414 = vsel %vm407, %v410, %v413
      %v415 = vsel %vm405, nan, %v414
      %v416 = vand.u32 2147483647, %v203
      %vm417 = vcmp.le.f32.partialorder %v416, 0.7853982
      %vm418 = vcmp.lt.s32.totalorder %v203, 0
      %v419 = vand.u32 %v203, 2139095040
      %v420 = vshrl.u32 %v419, 23
      %v421 = vsub.s32 %v420, 127
      %v422 = vand.u32 2147483647, %v203
      %v423 = vand.u32 %v422, 8388607
      %v424 = vor.u32 %v423, 8388608
      %v425 = vsub.s32 0, %v424
      %v426 = vadd.s32 %v421, 1
      %vm427 = vcmp.gt.s32.totalorder %v426, 0
      %v428 = vsel %vm427, %v426, 0
      %v429 = vshrl.u32 %v428, 5
      %v430 = vand.u32 %v428, 31
      %v431 = vsub.s32 32, %v430
      %v432 = vshrl.u32 683565275, %v431
      %v433 = vshll.u32 683565275, %v430
      %v434 = vshrl.u32 2475754826, %v431
      %v435 = vor.u32 %v433, %v434
      %v436 = vshll.u32 2475754826, %v430
      %v437 = vshrl.u32 2131351028, %v431
      %v438 = vor.u32 %v436, %v437
      %v439 = vshll.u32 2131351028, %v430
      %v440 = vshrl.u32 2102212464, %v431
      %v441 = vor.u32 %v439, %v440
      %v442 = vshll.u32 2102212464, %v430
      %v443 = vshrl.u32 920167782, %v431
      %v444 = vor.u32 %v442, %v443
      %v445 = vshll.u32 920167782, %v430
      %v446 = vshrl.u32 1326507024, %v431
      %v447 = vor.u32 %v445, %v446
      %vm448 = vcmp.lt.s32.totalorder %v429, 1
      %vm449 = vcmp.lt.s32.totalorder %v429, 2
      %vm450 = vcmp.lt.s32.totalorder %v429, 3
      %vm451 = vcmp.lt.s32.totalorder %v429, 4
      %v452 = vsel %vm448, %v432, %v435
      %v453 = vsel %vm451, %v441, 2102212464
      %v454 = vsel %vm450, %v438, %v453
      %v455 = vsel %vm449, %v452, %v454
      %v456 = vsel %vm448, %v435, %v438
      %v457 = vsel %vm451, %v444, 920167782
      %v458 = vsel %vm450, %v441, %v457
      %v459 = vsel %vm449, %v456, %v458
      %v460 = vsel %vm448, %v438, %v441
      %v461 = vsel %vm451, %v447, 1326507024
      %v462 = vsel %vm450, %v444, %v461
      %v463 = vsel %vm449, %v460, %v462
      %v464 = vshll.u32 %v424, 8
      %v465 = vmul.u32.u64.compose %v464, %v463
      %v466 = vextract.low.u32 %v465
      %v467 = vextract.high.u32 %v465
      %v468 = vmul.u32.u64.compose %v464, %v459
      %v469 = vextract.low.u32 %v468
      %v470 = vextract.high.u32 %v468
      %v471 = vmul.u32 %v464, %v455
      %v472 = vadd.s32 %v467, %v469
      %vm473 = vc.u32 %v467, %v469
      %v474 = vadd.s32 %v470, 1
      %v475 = vsel %vm473, %v474, %v470
      %v476 = vadd.s32 %v471, %v475
      %v477 = vadd.s32 %v476, 536870912
      %v478 = vshrl.u32 %v477, 30
      %v479 = vshll.u32 %v478, 30
      %v480 = vsub.s32 %v476, %v479
      %vm481 = vcmp.lt.s32.totalorder %v480, 0
      %v482 = vsub.s32 0, %v480
      %v483 = vsel %vm481, %v482, %v480
      %v484 = vclz %v483
      %v485 = vsub.s32 %v484, 2
      %vm486 = vcmp.gt.s32.totalorder 0, %v485
      %v487 = vsel %vm486, 0, %v485
      %v488 = vsub.s32 32, %v487
      %v489 = vshll.u32 %v480, %v487
      %v490 = vshrl.u32 %v472, %v488
      %v491 = vor.u32 %v489, %v490
      %v492 = vsub.s32 4294967266, %v487
      %v493 = vadd.s32 %v492, 127
      %v494 = vshll.u32 %v493, 23
      %v495 = vor.u32 4788187, %v494
      %v496 = vand.u32 2147483647, %v495
      %v498 = vcvt.s32.f32 %v491
      %v499 = vmul.f32 %v498, %v496
      %v500 = vxor.u32 %v499, 2147483648
      %v501 = vsel %vm418, %v500, %v499
      %v502 = vsub.s32 4, %v478
      %v503 = vsel %vm418, %v502, %v478
      %v504 = vsel %vm417, %v203, %v501
      %v505 = vsel %vm417, 0, %v503
      %v506 = vcosq.f32.pop %v504
      %v507 = vsinq.f32.pop %v504
      %vm508 = vweird.f32 %v203
      %v509 = vand.u32 %v505, 3
      %vm510 = vcmp.lt.s32.totalorder %v509, 2
      %vm511 = vcmp.eq.s32.totalorder %v509, 0
      %v512 = vxor.u32 %v507, 2147483648
      %v513 = vsel %vm511, %v506, %v512
      %vm514 = vcmp.eq.s32.totalorder %v509, 2
      %v515 = vxor.u32 %v506, 2147483648
      %v516 = vsel %vm514, %v515, %v507
      %v517 = vsel %vm510, %v513, %v516
      %v518 = vsel %vm508, nan, %v517
      %v519 = vand.u32 2147483647, %v204
      %vm520 = vcmp.le.f32.partialorder %v519, 0.7853982
      %vm521 = vcmp.lt.s32.totalorder %v204, 0
      %v522 = vand.u32 %v204, 2139095040
      %v523 = vshrl.u32 %v522, 23
      %v524 = vsub.s32 %v523, 127
      %v525 = vand.u32 2147483647, %v204
      %v526 = vand.u32 %v525, 8388607
      %v527 = vor.u32 %v526, 8388608
      %v528 = vsub.s32 0, %v527
      %v529 = vadd.s32 %v524, 1
      %vm530 = vcmp.gt.s32.totalorder %v529, 0
      %v531 = vsel %vm530, %v529, 0
      %v532 = vshrl.u32 %v531, 5
      %v533 = vand.u32 %v531, 31
      %v534 = vsub.s32 32, %v533
      %v535 = vshrl.u32 683565275, %v534
      %v536 = vshll.u32 683565275, %v533
      %v537 = vshrl.u32 2475754826, %v534
      %v538 = vor.u32 %v536, %v537
      %v539 = vshll.u32 2475754826, %v533
      %v540 = vshrl.u32 2131351028, %v534
      %v541 = vor.u32 %v539, %v540
      %v542 = vshll.u32 2131351028, %v533
      %v543 = vshrl.u32 2102212464, %v534
      %v544 = vor.u32 %v542, %v543
      %v545 = vshll.u32 2102212464, %v533
      %v546 = vshrl.u32 920167782, %v534
      %v547 = vor.u32 %v545, %v546
      %v548 = vshll.u32 920167782, %v533
      %v549 = vshrl.u32 1326507024, %v534
      %v550 = vor.u32 %v548, %v549
      %vm551 = vcmp.lt.s32.totalorder %v532, 1
      %vm552 = vcmp.lt.s32.totalorder %v532, 2
      %vm553 = vcmp.lt.s32.totalorder %v532, 3
      %vm554 = vcmp.lt.s32.totalorder %v532, 4
      %v555 = vsel %vm551, %v535, %v538
      %v556 = vsel %vm554, %v544, 2102212464
      %v557 = vsel %vm553, %v541, %v556
      %v558 = vsel %vm552, %v555, %v557
      %v559 = vsel %vm551, %v538, %v541
      %v560 = vsel %vm554, %v547, 920167782
      %v561 = vsel %vm553, %v544, %v560
      %v562 = vsel %vm552, %v559, %v561
      %v563 = vsel %vm551, %v541, %v544
      %v564 = vsel %vm554, %v550, 1326507024
      %v565 = vsel %vm553, %v547, %v564
      %v566 = vsel %vm552, %v563, %v565
      %v567 = vshll.u32 %v527, 8
      %v568 = vmul.u32.u64.compose %v567, %v566
      %v569 = vextract.low.u32 %v568
      %v570 = vextract.high.u32 %v568
      %v571 = vmul.u32.u64.compose %v567, %v562
      %v572 = vextract.low.u32 %v571
      %v573 = vextract.high.u32 %v571
      %v574 = vmul.u32 %v567, %v558
      %v575 = vadd.s32 %v570, %v572
      %vm576 = vc.u32 %v570, %v572
      %v577 = vadd.s32 %v573, 1
      %v578 = vsel %vm576, %v577, %v573
      %v579 = vadd.s32 %v574, %v578
      %v580 = vadd.s32 %v579, 536870912
      %v581 = vshrl.u32 %v580, 30
      %v582 = vshll.u32 %v581, 30
      %v583 = vsub.s32 %v579, %v582
      %vm584 = vcmp.lt.s32.totalorder %v583, 0
      %v585 = vsub.s32 0, %v583
      %v586 = vsel %vm584, %v585, %v583
      %v587 = vclz %v586
      %v588 = vsub.s32 %v587, 2
      %vm589 = vcmp.gt.s32.totalorder 0, %v588
      %v590 = vsel %vm589, 0, %v588
      %v591 = vsub.s32 32, %v590
      %v592 = vshll.u32 %v583, %v590
      %v593 = vshrl.u32 %v575, %v591
      %v594 = vor.u32 %v592, %v593
      %v595 = vsub.s32 4294967266, %v590
      %v596 = vadd.s32 %v595, 127
      %v597 = vshll.u32 %v596, 23
      %v598 = vor.u32 4788187, %v597
      %v599 = vand.u32 2147483647, %v598
      %v601 = vcvt.s32.f32 %v594
      %v602 = vmul.f32 %v601, %v599
      %v603 = vxor.u32 %v602, 2147483648
      %v604 = vsel %vm521, %v603, %v602
      %v605 = vsub.s32 4, %v581
      %v606 = vsel %vm521, %v605, %v581
      %v607 = vsel %vm520, %v204, %v604
      %v608 = vsel %vm520, 0, %v606
      %v609 = vcosq.f32.pop %v607
      %v610 = vsinq.f32.pop %v607
      %vm611 = vweird.f32 %v204
      %v612 = vand.u32 %v608, 3
      %vm613 = vcmp.lt.s32.totalorder %v612, 2
      %vm614 = vcmp.eq.s32.totalorder %v612, 0
      %v615 = vxor.u32 %v610, 2147483648
      %v616 = vsel %vm614, %v609, %v615
      %vm617 = vcmp.eq.s32.totalorder %v612, 2
      %v618 = vxor.u32 %v609, 2147483648
      %v619 = vsel %vm617, %v618, %v610
      %v620 = vsel %vm613, %v616, %v619
      %v621 = vsel %vm611, nan, %v620
      %v622 = vand.u32 2147483647, %v205
      %vm623 = vcmp.le.f32.partialorder %v622, 0.7853982
      %vm624 = vcmp.lt.s32.totalorder %v205, 0
      %v625 = vand.u32 %v205, 2139095040
      %v626 = vshrl.u32 %v625, 23
      %v627 = vsub.s32 %v626, 127
      %v628 = vand.u32 2147483647, %v205
      %v629 = vand.u32 %v628, 8388607
      %v630 = vor.u32 %v629, 8388608
      %v631 = vsub.s32 0, %v630
      %v632 = vadd.s32 %v627, 1
      %vm633 = vcmp.gt.s32.totalorder %v632, 0
      %v634 = vsel %vm633, %v632, 0
      %v635 = vshrl.u32 %v634, 5
      %v636 = vand.u32 %v634, 31
      %v637 = vsub.s32 32, %v636
      %v638 = vshrl.u32 683565275, %v637
      %v639 = vshll.u32 683565275, %v636
      %v640 = vshrl.u32 2475754826, %v637
      %v641 = vor.u32 %v639, %v640
      %v642 = vshll.u32 2475754826, %v636
      %v643 = vshrl.u32 2131351028, %v637
      %v644 = vor.u32 %v642, %v643
      %v645 = vshll.u32 2131351028, %v636
      %v646 = vshrl.u32 2102212464, %v637
      %v647 = vor.u32 %v645, %v646
      %v648 = vshll.u32 2102212464, %v636
      %v649 = vshrl.u32 920167782, %v637
      %v650 = vor.u32 %v648, %v649
      %v651 = vshll.u32 920167782, %v636
      %v652 = vshrl.u32 1326507024, %v637
      %v653 = vor.u32 %v651, %v652
      %vm654 = vcmp.lt.s32.totalorder %v635, 1
      %vm655 = vcmp.lt.s32.totalorder %v635, 2
      %vm656 = vcmp.lt.s32.totalorder %v635, 3
      %vm657 = vcmp.lt.s32.totalorder %v635, 4
      %v658 = vsel %vm654, %v638, %v641
      %v659 = vsel %vm657, %v647, 2102212464
      %v660 = vsel %vm656, %v644, %v659
      %v661 = vsel %vm655, %v658, %v660
      %v662 = vsel %vm654, %v641, %v644
      %v663 = vsel %vm657, %v650, 920167782
      %v664 = vsel %vm656, %v647, %v663
      %v665 = vsel %vm655, %v662, %v664
      %v666 = vsel %vm654, %v644, %v647
      %v667 = vsel %vm657, %v653, 1326507024
      %v668 = vsel %vm656, %v650, %v667
      %v669 = vsel %vm655, %v666, %v668
      %v670 = vshll.u32 %v630, 8
      %v671 = vmul.u32.u64.compose %v670, %v669
      %v672 = vextract.low.u32 %v671
      %v673 = vextract.high.u32 %v671
      %v674 = vmul.u32.u64.compose %v670, %v665
      %v675 = vextract.low.u32 %v674
      %v676 = vextract.high.u32 %v674
      %v677 = vmul.u32 %v670, %v661
      %v678 = vadd.s32 %v673, %v675
      %vm679 = vc.u32 %v673, %v675
      %v680 = vadd.s32 %v676, 1
      %v681 = vsel %vm679, %v680, %v676
      %v682 = vadd.s32 %v677, %v681
      %v683 = vadd.s32 %v682, 536870912
      %v684 = vshrl.u32 %v683, 30
      %v685 = vshll.u32 %v684, 30
      %v686 = vsub.s32 %v682, %v685
      %vm687 = vcmp.lt.s32.totalorder %v686, 0
      %v688 = vsub.s32 0, %v686
      %v689 = vsel %vm687, %v688, %v686
      %v690 = vclz %v689
      %v691 = vsub.s32 %v690, 2
      %vm692 = vcmp.gt.s32.totalorder 0, %v691
      %v693 = vsel %vm692, 0, %v691
      %v694 = vsub.s32 32, %v693
      %v695 = vshll.u32 %v686, %v693
      %v696 = vshrl.u32 %v678, %v694
      %v697 = vor.u32 %v695, %v696
      %v698 = vsub.s32 4294967266, %v693
      %v699 = vadd.s32 %v698, 127
      %v700 = vshll.u32 %v699, 23
      %v701 = vor.u32 4788187, %v700
      %v702 = vand.u32 2147483647, %v701
      %v704 = vcvt.s32.f32 %v697
      %v705 = vmul.f32 %v704, %v702
      %v706 = vxor.u32 %v705, 2147483648
      %v707 = vsel %vm624, %v706, %v705
      %v708 = vsub.s32 4, %v684
      %v709 = vsel %vm624, %v708, %v684
      %v710 = vsel %vm623, %v205, %v707
      %v711 = vsel %vm623, 0, %v709
      %v712 = vcosq.f32.pop %v710
      %v713 = vsinq.f32.pop %v710
      %vm714 = vweird.f32 %v205
      %v715 = vand.u32 %v711, 3
      %vm716 = vcmp.lt.s32.totalorder %v715, 2
      %vm717 = vcmp.eq.s32.totalorder %v715, 0
      %v718 = vxor.u32 %v713, 2147483648
      %v719 = vsel %vm717, %v712, %v718
      %vm720 = vcmp.eq.s32.totalorder %v715, 2
      %v721 = vxor.u32 %v712, 2147483648
      %v722 = vsel %vm720, %v721, %v713
      %v723 = vsel %vm716, %v719, %v722
      %v724 = vsel %vm714, nan, %v723
      %v725 = vand.u32 2147483647, %v206
      %vm726 = vcmp.le.f32.partialorder %v725, 0.7853982
      %vm727 = vcmp.lt.s32.totalorder %v206, 0
      %v728 = vand.u32 %v206, 2139095040
      %v729 = vshrl.u32 %v728, 23
      %v730 = vsub.s32 %v729, 127
      %v731 = vand.u32 2147483647, %v206
      %v732 = vand.u32 %v731, 8388607
      %v733 = vor.u32 %v732, 8388608
      %v734 = vsub.s32 0, %v733
      %v735 = vadd.s32 %v730, 1
      %vm736 = vcmp.gt.s32.totalorder %v735, 0
      %v737 = vsel %vm736, %v735, 0
      %v738 = vshrl.u32 %v737, 5
      %v739 = vand.u32 %v737, 31
      %v740 = vsub.s32 32, %v739
      %v741 = vshrl.u32 683565275, %v740
      %v742 = vshll.u32 683565275, %v739
      %v743 = vshrl.u32 2475754826, %v740
      %v744 = vor.u32 %v742, %v743
      %v745 = vshll.u32 2475754826, %v739
      %v746 = vshrl.u32 2131351028, %v740
      %v747 = vor.u32 %v745, %v746
      %v748 = vshll.u32 2131351028, %v739
      %v749 = vshrl.u32 2102212464, %v740
      %v750 = vor.u32 %v748, %v749
      %v751 = vshll.u32 2102212464, %v739
      %v752 = vshrl.u32 920167782, %v740
      %v753 = vor.u32 %v751, %v752
      %v754 = vshll.u32 920167782, %v739
      %v755 = vshrl.u32 1326507024, %v740
      %v756 = vor.u32 %v754, %v755
      %vm757 = vcmp.lt.s32.totalorder %v738, 1
      %vm758 = vcmp.lt.s32.totalorder %v738, 2
      %vm759 = vcmp.lt.s32.totalorder %v738, 3
      %vm760 = vcmp.lt.s32.totalorder %v738, 4
      %v761 = vsel %vm757, %v741, %v744
      %v762 = vsel %vm760, %v750, 2102212464
      %v763 = vsel %vm759, %v747, %v762
      %v764 = vsel %vm758, %v761, %v763
      %v765 = vsel %vm757, %v744, %v747
      %v766 = vsel %vm760, %v753, 920167782
      %v767 = vsel %vm759, %v750, %v766
      %v768 = vsel %vm758, %v765, %v767
      %v769 = vsel %vm757, %v747, %v750
      %v770 = vsel %vm760, %v756, 1326507024
      %v771 = vsel %vm759, %v753, %v770
      %v772 = vsel %vm758, %v769, %v771
      %v773 = vshll.u32 %v733, 8
      %v774 = vmul.u32.u64.compose %v773, %v772
      %v775 = vextract.low.u32 %v774
      %v776 = vextract.high.u32 %v774
      %v777 = vmul.u32.u64.compose %v773, %v768
      %v778 = vextract.low.u32 %v777
      %v779 = vextract.high.u32 %v777
      %v780 = vmul.u32 %v773, %v764
      %v781 = vadd.s32 %v776, %v778
      %vm782 = vc.u32 %v776, %v778
      %v783 = vadd.s32 %v779, 1
      %v784 = vsel %vm782, %v783, %v779
      %v785 = vadd.s32 %v780, %v784
      %v786 = vadd.s32 %v785, 536870912
      %v787 = vshrl.u32 %v786, 30
      %v788 = vshll.u32 %v787, 30
      %v789 = vsub.s32 %v785, %v788
      %vm790 = vcmp.lt.s32.totalorder %v789, 0
      %v791 = vsub.s32 0, %v789
      %v792 = vsel %vm790, %v791, %v789
      %v793 = vclz %v792
      %v794 = vsub.s32 %v793, 2
      %vm795 = vcmp.gt.s32.totalorder 0, %v794
      %v796 = vsel %vm795, 0, %v794
      %v797 = vsub.s32 32, %v796
      %v798 = vshll.u32 %v789, %v796
      %v799 = vshrl.u32 %v781, %v797
      %v800 = vor.u32 %v798, %v799
      %v801 = vsub.s32 4294967266, %v796
      %v802 = vadd.s32 %v801, 127
      %v803 = vshll.u32 %v802, 23
      %v804 = vor.u32 4788187, %v803
      %v805 = vand.u32 2147483647, %v804
      %v807 = vcvt.s32.f32 %v800
      %v808 = vmul.f32 %v807, %v805
      %v809 = vxor.u32 %v808, 2147483648
      %v810 = vsel %vm727, %v809, %v808
      %v811 = vsub.s32 4, %v787
      %v812 = vsel %vm727, %v811, %v787
      %v813 = vsel %vm726, %v206, %v810
      %v814 = vsel %vm726, 0, %v812
      %v815 = vcosq.f32.pop %v813
      %v816 = vsinq.f32.pop %v813
      %vm817 = vweird.f32 %v206
      %v818 = vand.u32 %v814, 3
      %vm819 = vcmp.lt.s32.totalorder %v818, 2
      %vm820 = vcmp.eq.s32.totalorder %v818, 0
      %v821 = vxor.u32 %v816, 2147483648
      %v822 = vsel %vm820, %v815, %v821
      %vm823 = vcmp.eq.s32.totalorder %v818, 2
      %v824 = vxor.u32 %v815, 2147483648
      %v825 = vsel %vm823, %v824, %v816
      %v826 = vsel %vm819, %v822, %v825
      %v827 = vsel %vm817, nan, %v826
      %v828 = vand.u32 2147483647, %v207
      %vm829 = vcmp.le.f32.partialorder %v828, 0.7853982
      %vm830 = vcmp.lt.s32.totalorder %v207, 0
      %v831 = vand.u32 %v207, 2139095040
      %v832 = vshrl.u32 %v831, 23
      %v833 = vsub.s32 %v832, 127
      %v834 = vand.u32 2147483647, %v207
      %v835 = vand.u32 %v834, 8388607
      %v836 = vor.u32 %v835, 8388608
      %v837 = vsub.s32 0, %v836
      %v838 = vadd.s32 %v833, 1
      %vm839 = vcmp.gt.s32.totalorder %v838, 0
      %v840 = vsel %vm839, %v838, 0
      %v841 = vshrl.u32 %v840, 5
      %v842 = vand.u32 %v840, 31
      %v843 = vsub.s32 32, %v842
      %v844 = vshrl.u32 683565275, %v843
      %v845 = vshll.u32 683565275, %v842
      %v846 = vshrl.u32 2475754826, %v843
      %v847 = vor.u32 %v845, %v846
      %v848 = vshll.u32 2475754826, %v842
      %v849 = vshrl.u32 2131351028, %v843
      %v850 = vor.u32 %v848, %v849
      %v851 = vshll.u32 2131351028, %v842
      %v852 = vshrl.u32 2102212464, %v843
      %v853 = vor.u32 %v851, %v852
      %v854 = vshll.u32 2102212464, %v842
      %v855 = vshrl.u32 920167782, %v843
      %v856 = vor.u32 %v854, %v855
      %v857 = vshll.u32 920167782, %v842
      %v858 = vshrl.u32 1326507024, %v843
      %v859 = vor.u32 %v857, %v858
      %vm860 = vcmp.lt.s32.totalorder %v841, 1
      %vm861 = vcmp.lt.s32.totalorder %v841, 2
      %vm862 = vcmp.lt.s32.totalorder %v841, 3
      %vm863 = vcmp.lt.s32.totalorder %v841, 4
      %v864 = vsel %vm860, %v844, %v847
      %v865 = vsel %vm863, %v853, 2102212464
      %v866 = vsel %vm862, %v850, %v865
      %v867 = vsel %vm861, %v864, %v866
      %v868 = vsel %vm860, %v847, %v850
      %v869 = vsel %vm863, %v856, 920167782
      %v870 = vsel %vm862, %v853, %v869
      %v871 = vsel %vm861, %v868, %v870
      %v872 = vsel %vm860, %v850, %v853
      %v873 = vsel %vm863, %v859, 1326507024
      %v874 = vsel %vm862, %v856, %v873
      %v875 = vsel %vm861, %v872, %v874
      %v876 = vshll.u32 %v836, 8
      %v877 = vmul.u32.u64.compose %v876, %v875
      %v878 = vextract.low.u32 %v877
      %v879 = vextract.high.u32 %v877
      %v880 = vmul.u32.u64.compose %v876, %v871
      %v881 = vextract.low.u32 %v880
      %v882 = vextract.high.u32 %v880
      %v883 = vmul.u32 %v876, %v867
      %v884 = vadd.s32 %v879, %v881
      %vm885 = vc.u32 %v879, %v881
      %v886 = vadd.s32 %v882, 1
      %v887 = vsel %vm885, %v886, %v882
      %v888 = vadd.s32 %v883, %v887
      %v889 = vadd.s32 %v888, 536870912
      %v890 = vshrl.u32 %v889, 30
      %v891 = vshll.u32 %v890, 30
      %v892 = vsub.s32 %v888, %v891
      %vm893 = vcmp.lt.s32.totalorder %v892, 0
      %v894 = vsub.s32 0, %v892
      %v895 = vsel %vm893, %v894, %v892
      %v896 = vclz %v895
      %v897 = vsub.s32 %v896, 2
      %vm898 = vcmp.gt.s32.totalorder 0, %v897
      %v899 = vsel %vm898, 0, %v897
      %v900 = vsub.s32 32, %v899
      %v901 = vshll.u32 %v892, %v899
      %v902 = vshrl.u32 %v884, %v900
      %v903 = vor.u32 %v901, %v902
      %v904 = vsub.s32 4294967266, %v899
      %v905 = vadd.s32 %v904, 127
      %v906 = vshll.u32 %v905, 23
      %v907 = vor.u32 4788187, %v906
      %v908 = vand.u32 2147483647, %v907
      %v910 = vcvt.s32.f32 %v903
      %v911 = vmul.f32 %v910, %v908
      %v912 = vxor.u32 %v911, 2147483648
      %v913 = vsel %vm830, %v912, %v911
      %v914 = vsub.s32 4, %v890
      %v915 = vsel %vm830, %v914, %v890
      %v916 = vsel %vm829, %v207, %v913
      %v917 = vsel %vm829, 0, %v915
      %v918 = vcosq.f32.pop %v916
      %v919 = vsinq.f32.pop %v916
      %vm920 = vweird.f32 %v207
      %v921 = vand.u32 %v917, 3
      %vm922 = vcmp.lt.s32.totalorder %v921, 2
      %vm923 = vcmp.eq.s32.totalorder %v921, 0
      %v924 = vxor.u32 %v919, 2147483648
      %v925 = vsel %vm923, %v918, %v924
      %vm926 = vcmp.eq.s32.totalorder %v921, 2
      %v927 = vxor.u32 %v918, 2147483648
      %v928 = vsel %vm926, %v927, %v919
      %v929 = vsel %vm922, %v925, %v928
      %v930 = vsel %vm920, nan, %v929
      %v931 = vand.u32 2147483647, %v208
      %vm932 = vcmp.le.f32.partialorder %v931, 0.7853982
      %vm933 = vcmp.lt.s32.totalorder %v208, 0
      %v934 = vand.u32 %v208, 2139095040
      %v935 = vshrl.u32 %v934, 23
      %v936 = vsub.s32 %v935, 127
      %v937 = vand.u32 2147483647, %v208
      %v938 = vand.u32 %v937, 8388607
      %v939 = vor.u32 %v938, 8388608
      %v940 = vsub.s32 0, %v939
      %v941 = vadd.s32 %v936, 1
      %vm942 = vcmp.gt.s32.totalorder %v941, 0
      %v943 = vsel %vm942, %v941, 0
      %v944 = vshrl.u32 %v943, 5
      %v945 = vand.u32 %v943, 31
      %v946 = vsub.s32 32, %v945
      %v947 = vshrl.u32 683565275, %v946
      %v948 = vshll.u32 683565275, %v945
      %v949 = vshrl.u32 2475754826, %v946
      %v950 = vor.u32 %v948, %v949
      %v951 = vshll.u32 2475754826, %v945
      %v952 = vshrl.u32 2131351028, %v946
      %v953 = vor.u32 %v951, %v952
      %v954 = vshll.u32 2131351028, %v945
      %v955 = vshrl.u32 2102212464, %v946
      %v956 = vor.u32 %v954, %v955
      %v957 = vshll.u32 2102212464, %v945
      %v958 = vshrl.u32 920167782, %v946
      %v959 = vor.u32 %v957, %v958
      %v960 = vshll.u32 920167782, %v945
      %v961 = vshrl.u32 1326507024, %v946
      %v962 = vor.u32 %v960, %v961
      %vm963 = vcmp.lt.s32.totalorder %v944, 1
      %vm964 = vcmp.lt.s32.totalorder %v944, 2
      %vm965 = vcmp.lt.s32.totalorder %v944, 3
      %vm966 = vcmp.lt.s32.totalorder %v944, 4
      %v967 = vsel %vm963, %v947, %v950
      %v968 = vsel %vm966, %v956, 2102212464
      %v969 = vsel %vm965, %v953, %v968
      %v970 = vsel %vm964, %v967, %v969
      %v971 = vsel %vm963, %v950, %v953
      %v972 = vsel %vm966, %v959, 920167782
      %v973 = vsel %vm965, %v956, %v972
      %v974 = vsel %vm964, %v971, %v973
      %v975 = vsel %vm963, %v953, %v956
      %v976 = vsel %vm966, %v962, 1326507024
      %v977 = vsel %vm965, %v959, %v976
      %v978 = vsel %vm964, %v975, %v977
      %v979 = vshll.u32 %v939, 8
      %v980 = vmul.u32.u64.compose %v979, %v978
      %v981 = vextract.low.u32 %v980
      %v982 = vextract.high.u32 %v980
      %v983 = vmul.u32.u64.compose %v979, %v974
      %v984 = vextract.low.u32 %v983
      %v985 = vextract.high.u32 %v983
      %v986 = vmul.u32 %v979, %v970
      %v987 = vadd.s32 %v982, %v984
      %vm988 = vc.u32 %v982, %v984
      %v989 = vadd.s32 %v985, 1
      %v990 = vsel %vm988, %v989, %v985
      %v991 = vadd.s32 %v986, %v990
      %v992 = vadd.s32 %v991, 536870912
      %v993 = vshrl.u32 %v992, 30
      %v994 = vshll.u32 %v993, 30
      %v995 = vsub.s32 %v991, %v994
      %vm996 = vcmp.lt.s32.totalorder %v995, 0
      %v997 = vsub.s32 0, %v995
      %v998 = vsel %vm996, %v997, %v995
      %v999 = vclz %v998
      %v1000 = vsub.s32 %v999, 2
      %vm1001 = vcmp.gt.s32.totalorder 0, %v1000
      %v1002 = vsel %vm1001, 0, %v1000
      %v1003 = vsub.s32 32, %v1002
      %v1004 = vshll.u32 %v995, %v1002
      %v1005 = vshrl.u32 %v987, %v1003
      %v1006 = vor.u32 %v1004, %v1005
      %v1007 = vsub.s32 4294967266, %v1002
      %v1008 = vadd.s32 %v1007, 127
      %v1009 = vshll.u32 %v1008, 23
      %v1010 = vor.u32 4788187, %v1009
      %v1011 = vand.u32 2147483647, %v1010
      %v1013 = vcvt.s32.f32 %v1006
      %v1014 = vmul.f32 %v1013, %v1011
      %v1015 = vxor.u32 %v1014, 2147483648
      %v1016 = vsel %vm933, %v1015, %v1014
      %v1017 = vsub.s32 4, %v993
      %v1018 = vsel %vm933, %v1017, %v993
      %v1019 = vsel %vm932, %v208, %v1016
      %v1020 = vsel %vm932, 0, %v1018
      %v1021 = vcosq.f32.pop %v1019
      %v1022 = vsinq.f32.pop %v1019
      %vm1023 = vweird.f32 %v208
      %v1024 = vand.u32 %v1020, 3
      %vm1025 = vcmp.lt.s32.totalorder %v1024, 2
      %vm1026 = vcmp.eq.s32.totalorder %v1024, 0
      %v1027 = vxor.u32 %v1022, 2147483648
      %v1028 = vsel %vm1026, %v1021, %v1027
      %vm1029 = vcmp.eq.s32.totalorder %v1024, 2
      %v1030 = vxor.u32 %v1021, 2147483648
      %v1031 = vsel %vm1029, %v1030, %v1022
      %v1032 = vsel %vm1025, %v1028, %v1031
      %v1033 = vsel %vm1023, nan, %v1032
      %v1034 = vand.u32 2147483647, %v209
      %vm1035 = vcmp.le.f32.partialorder %v1034, 0.7853982
      %vm1036 = vcmp.lt.s32.totalorder %v209, 0
      %v1037 = vand.u32 %v209, 2139095040
      %v1038 = vshrl.u32 %v1037, 23
      %v1039 = vsub.s32 %v1038, 127
      %v1040 = vand.u32 2147483647, %v209
      %v1041 = vand.u32 %v1040, 8388607
      %v1042 = vor.u32 %v1041, 8388608
      %v1043 = vsub.s32 0, %v1042
      %v1044 = vadd.s32 %v1039, 1
      %vm1045 = vcmp.gt.s32.totalorder %v1044, 0
      %v1046 = vsel %vm1045, %v1044, 0
      %v1047 = vshrl.u32 %v1046, 5
      %v1048 = vand.u32 %v1046, 31
      %v1049 = vsub.s32 32, %v1048
      %v1050 = vshrl.u32 683565275, %v1049
      %v1051 = vshll.u32 683565275, %v1048
      %v1052 = vshrl.u32 2475754826, %v1049
      %v1053 = vor.u32 %v1051, %v1052
      %v1054 = vshll.u32 2475754826, %v1048
      %v1055 = vshrl.u32 2131351028, %v1049
      %v1056 = vor.u32 %v1054, %v1055
      %v1057 = vshll.u32 2131351028, %v1048
      %v1058 = vshrl.u32 2102212464, %v1049
      %v1059 = vor.u32 %v1057, %v1058
      %v1060 = vshll.u32 2102212464, %v1048
      %v1061 = vshrl.u32 920167782, %v1049
      %v1062 = vor.u32 %v1060, %v1061
      %v1063 = vshll.u32 920167782, %v1048
      %v1064 = vshrl.u32 1326507024, %v1049
      %v1065 = vor.u32 %v1063, %v1064
      %vm1066 = vcmp.lt.s32.totalorder %v1047, 1
      %vm1067 = vcmp.lt.s32.totalorder %v1047, 2
      %vm1068 = vcmp.lt.s32.totalorder %v1047, 3
      %vm1069 = vcmp.lt.s32.totalorder %v1047, 4
      %v1070 = vsel %vm1066, %v1050, %v1053
      %v1071 = vsel %vm1069, %v1059, 2102212464
      %v1072 = vsel %vm1068, %v1056, %v1071
      %v1073 = vsel %vm1067, %v1070, %v1072
      %v1074 = vsel %vm1066, %v1053, %v1056
      %v1075 = vsel %vm1069, %v1062, 920167782
      %v1076 = vsel %vm1068, %v1059, %v1075
      %v1077 = vsel %vm1067, %v1074, %v1076
      %v1078 = vsel %vm1066, %v1056, %v1059
      %v1079 = vsel %vm1069, %v1065, 1326507024
      %v1080 = vsel %vm1068, %v1062, %v1079
      %v1081 = vsel %vm1067, %v1078, %v1080
      %v1082 = vshll.u32 %v1042, 8
      %v1083 = vmul.u32.u64.compose %v1082, %v1081
      %v1084 = vextract.low.u32 %v1083
      %v1085 = vextract.high.u32 %v1083
      %v1086 = vmul.u32.u64.compose %v1082, %v1077
      %v1087 = vextract.low.u32 %v1086
      %v1088 = vextract.high.u32 %v1086
      %v1089 = vmul.u32 %v1082, %v1073
      %v1090 = vadd.s32 %v1085, %v1087
      %vm1091 = vc.u32 %v1085, %v1087
      %v1092 = vadd.s32 %v1088, 1
      %v1093 = vsel %vm1091, %v1092, %v1088
      %v1094 = vadd.s32 %v1089, %v1093
      %v1095 = vadd.s32 %v1094, 536870912
      %v1096 = vshrl.u32 %v1095, 30
      %v1097 = vshll.u32 %v1096, 30
      %v1098 = vsub.s32 %v1094, %v1097
      %vm1099 = vcmp.lt.s32.totalorder %v1098, 0
      %v1100 = vsub.s32 0, %v1098
      %v1101 = vsel %vm1099, %v1100, %v1098
      %v1102 = vclz %v1101
      %v1103 = vsub.s32 %v1102, 2
      %vm1104 = vcmp.gt.s32.totalorder 0, %v1103
      %v1105 = vsel %vm1104, 0, %v1103
      %v1106 = vsub.s32 32, %v1105
      %v1107 = vshll.u32 %v1098, %v1105
      %v1108 = vshrl.u32 %v1090, %v1106
      %v1109 = vor.u32 %v1107, %v1108
      %v1110 = vsub.s32 4294967266, %v1105
      %v1111 = vadd.s32 %v1110, 127
      %v1112 = vshll.u32 %v1111, 23
      %v1113 = vor.u32 4788187, %v1112
      %v1114 = vand.u32 2147483647, %v1113
      %v1116 = vcvt.s32.f32 %v1109
      %v1117 = vmul.f32 %v1116, %v1114
      %v1118 = vxor.u32 %v1117, 2147483648
      %v1119 = vsel %vm1036, %v1118, %v1117
      %v1120 = vsub.s32 4, %v1096
      %v1121 = vsel %vm1036, %v1120, %v1096
      %v1122 = vsel %vm1035, %v209, %v1119
      %v1123 = vsel %vm1035, 0, %v1121
      %v1124 = vcosq.f32.pop %v1122
      %v1125 = vsinq.f32.pop %v1122
      %vm1126 = vweird.f32 %v209
      %v1127 = vand.u32 %v1123, 3
      %vm1128 = vcmp.lt.s32.totalorder %v1127, 2
      %vm1129 = vcmp.eq.s32.totalorder %v1127, 0
      %v1130 = vxor.u32 %v1125, 2147483648
      %v1131 = vsel %vm1129, %v1124, %v1130
      %vm1132 = vcmp.eq.s32.totalorder %v1127, 2
      %v1133 = vxor.u32 %v1124, 2147483648
      %v1134 = vsel %vm1132, %v1133, %v1125
      %v1135 = vsel %vm1128, %v1131, %v1134
      %v1136 = vsel %vm1126, nan, %v1135
      %v1137 = vmul.f32 %v192, %v312
      %v1138 = vmul.f32 %v193, %v415
      %v1139 = vmul.f32 %v194, %v518
      %v1140 = vmul.f32 %v195, %v621
      %v1141 = vmul.f32 %v196, %v724
      %v1142 = vmul.f32 %v197, %v827
      %v1143 = vmul.f32 %v198, %v930
      %v1144 = vmul.f32 %v199, %v1033
      %v1145 = vmul.f32 %v200, %v1136
      %v1146 = vand.u32 2147483647, %v201
      %vm1147 = vcmp.le.f32.partialorder %v1146, 0.7853982
      %vm1148 = vcmp.lt.s32.totalorder %v201, 0
      %v1149 = vand.u32 %v201, 2139095040
      %v1150 = vshrl.u32 %v1149, 23
      %v1151 = vsub.s32 %v1150, 127
      %v1152 = vand.u32 2147483647, %v201
      %v1153 = vand.u32 %v1152, 8388607
      %v1154 = vor.u32 %v1153, 8388608
      %v1155 = vsub.s32 0, %v1154
      %v1156 = vadd.s32 %v1151, 1
      %vm1157 = vcmp.gt.s32.totalorder %v1156, 0
      %v1158 = vsel %vm1157, %v1156, 0
      %v1159 = vshrl.u32 %v1158, 5
      %v1160 = vand.u32 %v1158, 31
      %v1161 = vsub.s32 32, %v1160
      %v1162 = vshrl.u32 683565275, %v1161
      %v1163 = vshll.u32 683565275, %v1160
      %v1164 = vshrl.u32 2475754826, %v1161
      %v1165 = vor.u32 %v1163, %v1164
      %v1166 = vshll.u32 2475754826, %v1160
      %v1167 = vshrl.u32 2131351028, %v1161
      %v1168 = vor.u32 %v1166, %v1167
      %v1169 = vshll.u32 2131351028, %v1160
      %v1170 = vshrl.u32 2102212464, %v1161
      %v1171 = vor.u32 %v1169, %v1170
      %v1172 = vshll.u32 2102212464, %v1160
      %v1173 = vshrl.u32 920167782, %v1161
      %v1174 = vor.u32 %v1172, %v1173
      %v1175 = vshll.u32 920167782, %v1160
      %v1176 = vshrl.u32 1326507024, %v1161
      %v1177 = vor.u32 %v1175, %v1176
      %vm1178 = vcmp.lt.s32.totalorder %v1159, 1
      %vm1179 = vcmp.lt.s32.totalorder %v1159, 2
      %vm1180 = vcmp.lt.s32.totalorder %v1159, 3
      %vm1181 = vcmp.lt.s32.totalorder %v1159, 4
      %v1182 = vsel %vm1178, %v1162, %v1165
      %v1183 = vsel %vm1181, %v1171, 2102212464
      %v1184 = vsel %vm1180, %v1168, %v1183
      %v1185 = vsel %vm1179, %v1182, %v1184
      %v1186 = vsel %vm1178, %v1165, %v1168
      %v1187 = vsel %vm1181, %v1174, 920167782
      %v1188 = vsel %vm1180, %v1171, %v1187
      %v1189 = vsel %vm1179, %v1186, %v1188
      %v1190 = vsel %vm1178, %v1168, %v1171
      %v1191 = vsel %vm1181, %v1177, 1326507024
      %v1192 = vsel %vm1180, %v1174, %v1191
      %v1193 = vsel %vm1179, %v1190, %v1192
      %v1194 = vshll.u32 %v1154, 8
      %v1195 = vmul.u32.u64.compose %v1194, %v1193
      %v1196 = vextract.low.u32 %v1195
      %v1197 = vextract.high.u32 %v1195
      %v1198 = vmul.u32.u64.compose %v1194, %v1189
      %v1199 = vextract.low.u32 %v1198
      %v1200 = vextract.high.u32 %v1198
      %v1201 = vmul.u32 %v1194, %v1185
      %v1202 = vadd.s32 %v1197, %v1199
      %vm1203 = vc.u32 %v1197, %v1199
      %v1204 = vadd.s32 %v1200, 1
      %v1205 = vsel %vm1203, %v1204, %v1200
      %v1206 = vadd.s32 %v1201, %v1205
      %v1207 = vadd.s32 %v1206, 536870912
      %v1208 = vshrl.u32 %v1207, 30
      %v1209 = vshll.u32 %v1208, 30
      %v1210 = vsub.s32 %v1206, %v1209
      %vm1211 = vcmp.lt.s32.totalorder %v1210, 0
      %v1212 = vsub.s32 0, %v1210
      %v1213 = vsel %vm1211, %v1212, %v1210
      %v1214 = vclz %v1213
      %v1215 = vsub.s32 %v1214, 2
      %vm1216 = vcmp.gt.s32.totalorder 0, %v1215
      %v1217 = vsel %vm1216, 0, %v1215
      %v1218 = vsub.s32 32, %v1217
      %v1219 = vshll.u32 %v1210, %v1217
      %v1220 = vshrl.u32 %v1202, %v1218
      %v1221 = vor.u32 %v1219, %v1220
      %v1222 = vsub.s32 4294967266, %v1217
      %v1223 = vadd.s32 %v1222, 127
      %v1224 = vshll.u32 %v1223, 23
      %v1225 = vor.u32 4788187, %v1224
      %v1226 = vand.u32 2147483647, %v1225
      %v1228 = vcvt.s32.f32 %v1221
      %v1229 = vmul.f32 %v1228, %v1226
      %v1230 = vxor.u32 %v1229, 2147483648
      %v1231 = vsel %vm1148, %v1230, %v1229
      %v1232 = vsub.s32 4, %v1208
      %v1233 = vsel %vm1148, %v1232, %v1208
      %v1234 = vsel %vm1147, %v201, %v1231
      %v1235 = vsel %vm1147, 0, %v1233
      %v1236 = vcosq.f32.pop %v1234
      %v1237 = vsinq.f32.pop %v1234
      %vm1238 = vweird.f32 %v201
      %v1239 = vadd.s32 %v1235, 3
      %v1240 = vand.u32 %v1239, 3
      %vm1241 = vcmp.lt.s32.totalorder %v1240, 2
      %vm1242 = vcmp.eq.s32.totalorder %v1240, 0
      %v1243 = vxor.u32 %v1237, 2147483648
      %v1244 = vsel %vm1242, %v1236, %v1243
      %vm1245 = vcmp.eq.s32.totalorder %v1240, 2
      %v1246 = vxor.u32 %v1236, 2147483648
      %v1247 = vsel %vm1245, %v1246, %v1237
      %v1248 = vsel %vm1241, %v1244, %v1247
      %v1249 = vsel %vm1238, nan, %v1248
      %v1250 = vand.u32 2147483647, %v202
      %vm1251 = vcmp.le.f32.partialorder %v1250, 0.7853982
      %vm1252 = vcmp.lt.s32.totalorder %v202, 0
      %v1253 = vand.u32 %v202, 2139095040
      %v1254 = vshrl.u32 %v1253, 23
      %v1255 = vsub.s32 %v1254, 127
      %v1256 = vand.u32 2147483647, %v202
      %v1257 = vand.u32 %v1256, 8388607
      %v1258 = vor.u32 %v1257, 8388608
      %v1259 = vsub.s32 0, %v1258
      %v1260 = vadd.s32 %v1255, 1
      %vm1261 = vcmp.gt.s32.totalorder %v1260, 0
      %v1262 = vsel %vm1261, %v1260, 0
      %v1263 = vshrl.u32 %v1262, 5
      %v1264 = vand.u32 %v1262, 31
      %v1265 = vsub.s32 32, %v1264
      %v1266 = vshrl.u32 683565275, %v1265
      %v1267 = vshll.u32 683565275, %v1264
      %v1268 = vshrl.u32 2475754826, %v1265
      %v1269 = vor.u32 %v1267, %v1268
      %v1270 = vshll.u32 2475754826, %v1264
      %v1271 = vshrl.u32 2131351028, %v1265
      %v1272 = vor.u32 %v1270, %v1271
      %v1273 = vshll.u32 2131351028, %v1264
      %v1274 = vshrl.u32 2102212464, %v1265
      %v1275 = vor.u32 %v1273, %v1274
      %v1276 = vshll.u32 2102212464, %v1264
      %v1277 = vshrl.u32 920167782, %v1265
      %v1278 = vor.u32 %v1276, %v1277
      %v1279 = vshll.u32 920167782, %v1264
      %v1280 = vshrl.u32 1326507024, %v1265
      %v1281 = vor.u32 %v1279, %v1280
      %vm1282 = vcmp.lt.s32.totalorder %v1263, 1
      %vm1283 = vcmp.lt.s32.totalorder %v1263, 2
      %vm1284 = vcmp.lt.s32.totalorder %v1263, 3
      %vm1285 = vcmp.lt.s32.totalorder %v1263, 4
      %v1286 = vsel %vm1282, %v1266, %v1269
      %v1287 = vsel %vm1285, %v1275, 2102212464
      %v1288 = vsel %vm1284, %v1272, %v1287
      %v1289 = vsel %vm1283, %v1286, %v1288
      %v1290 = vsel %vm1282, %v1269, %v1272
      %v1291 = vsel %vm1285, %v1278, 920167782
      %v1292 = vsel %vm1284, %v1275, %v1291
      %v1293 = vsel %vm1283, %v1290, %v1292
      %v1294 = vsel %vm1282, %v1272, %v1275
      %v1295 = vsel %vm1285, %v1281, 1326507024
      %v1296 = vsel %vm1284, %v1278, %v1295
      %v1297 = vsel %vm1283, %v1294, %v1296
      %v1298 = vshll.u32 %v1258, 8
      %v1299 = vmul.u32.u64.compose %v1298, %v1297
      %v1300 = vextract.low.u32 %v1299
      %v1301 = vextract.high.u32 %v1299
      %v1302 = vmul.u32.u64.compose %v1298, %v1293
      %v1303 = vextract.low.u32 %v1302
      %v1304 = vextract.high.u32 %v1302
      %v1305 = vmul.u32 %v1298, %v1289
      %v1306 = vadd.s32 %v1301, %v1303
      %vm1307 = vc.u32 %v1301, %v1303
      %v1308 = vadd.s32 %v1304, 1
      %v1309 = vsel %vm1307, %v1308, %v1304
      %v1310 = vadd.s32 %v1305, %v1309
      %v1311 = vadd.s32 %v1310, 536870912
      %v1312 = vshrl.u32 %v1311, 30
      %v1313 = vshll.u32 %v1312, 30
      %v1314 = vsub.s32 %v1310, %v1313
      %vm1315 = vcmp.lt.s32.totalorder %v1314, 0
      %v1316 = vsub.s32 0, %v1314
      %v1317 = vsel %vm1315, %v1316, %v1314
      %v1318 = vclz %v1317
      %v1319 = vsub.s32 %v1318, 2
      %vm1320 = vcmp.gt.s32.totalorder 0, %v1319
      %v1321 = vsel %vm1320, 0, %v1319
      %v1322 = vsub.s32 32, %v1321
      %v1323 = vshll.u32 %v1314, %v1321
      %v1324 = vshrl.u32 %v1306, %v1322
      %v1325 = vor.u32 %v1323, %v1324
      %v1326 = vsub.s32 4294967266, %v1321
      %v1327 = vadd.s32 %v1326, 127
      %v1328 = vshll.u32 %v1327, 23
      %v1329 = vor.u32 4788187, %v1328
      %v1330 = vand.u32 2147483647, %v1329
      %v1332 = vcvt.s32.f32 %v1325
      %v1333 = vmul.f32 %v1332, %v1330
      %v1334 = vxor.u32 %v1333, 2147483648
      %v1335 = vsel %vm1252, %v1334, %v1333
      %v1336 = vsub.s32 4, %v1312
      %v1337 = vsel %vm1252, %v1336, %v1312
      %v1338 = vsel %vm1251, %v202, %v1335
      %v1339 = vsel %vm1251, 0, %v1337
      %v1340 = vcosq.f32.pop %v1338
      %v1341 = vsinq.f32.pop %v1338
      %vm1342 = vweird.f32 %v202
      %v1343 = vadd.s32 %v1339, 3
      %v1344 = vand.u32 %v1343, 3
      %vm1345 = vcmp.lt.s32.totalorder %v1344, 2
      %vm1346 = vcmp.eq.s32.totalorder %v1344, 0
      %v1347 = vxor.u32 %v1341, 2147483648
      %v1348 = vsel %vm1346, %v1340, %v1347
      %vm1349 = vcmp.eq.s32.totalorder %v1344, 2
      %v1350 = vxor.u32 %v1340, 2147483648
      %v1351 = vsel %vm1349, %v1350, %v1341
      %v1352 = vsel %vm1345, %v1348, %v1351
      %v1353 = vsel %vm1342, nan, %v1352
      %v1354 = vand.u32 2147483647, %v203
      %vm1355 = vcmp.le.f32.partialorder %v1354, 0.7853982
      %vm1356 = vcmp.lt.s32.totalorder %v203, 0
      %v1357 = vand.u32 %v203, 2139095040
      %v1358 = vshrl.u32 %v1357, 23
      %v1359 = vsub.s32 %v1358, 127
      %v1360 = vand.u32 2147483647, %v203
      %v1361 = vand.u32 %v1360, 8388607
      %v1362 = vor.u32 %v1361, 8388608
      %v1363 = vsub.s32 0, %v1362
      %v1364 = vadd.s32 %v1359, 1
      %vm1365 = vcmp.gt.s32.totalorder %v1364, 0
      %v1366 = vsel %vm1365, %v1364, 0
      %v1367 = vshrl.u32 %v1366, 5
      %v1368 = vand.u32 %v1366, 31
      %v1369 = vsub.s32 32, %v1368
      %v1370 = vshrl.u32 683565275, %v1369
      %v1371 = vshll.u32 683565275, %v1368
      %v1372 = vshrl.u32 2475754826, %v1369
      %v1373 = vor.u32 %v1371, %v1372
      %v1374 = vshll.u32 2475754826, %v1368
      %v1375 = vshrl.u32 2131351028, %v1369
      %v1376 = vor.u32 %v1374, %v1375
      %v1377 = vshll.u32 2131351028, %v1368
      %v1378 = vshrl.u32 2102212464, %v1369
      %v1379 = vor.u32 %v1377, %v1378
      %v1380 = vshll.u32 2102212464, %v1368
      %v1381 = vshrl.u32 920167782, %v1369
      %v1382 = vor.u32 %v1380, %v1381
      %v1383 = vshll.u32 920167782, %v1368
      %v1384 = vshrl.u32 1326507024, %v1369
      %v1385 = vor.u32 %v1383, %v1384
      %vm1386 = vcmp.lt.s32.totalorder %v1367, 1
      %vm1387 = vcmp.lt.s32.totalorder %v1367, 2
      %vm1388 = vcmp.lt.s32.totalorder %v1367, 3
      %vm1389 = vcmp.lt.s32.totalorder %v1367, 4
      %v1390 = vsel %vm1386, %v1370, %v1373
      %v1391 = vsel %vm1389, %v1379, 2102212464
      %v1392 = vsel %vm1388, %v1376, %v1391
      %v1393 = vsel %vm1387, %v1390, %v1392
      %v1394 = vsel %vm1386, %v1373, %v1376
      %v1395 = vsel %vm1389, %v1382, 920167782
      %v1396 = vsel %vm1388, %v1379, %v1395
      %v1397 = vsel %vm1387, %v1394, %v1396
      %v1398 = vsel %vm1386, %v1376, %v1379
      %v1399 = vsel %vm1389, %v1385, 1326507024
      %v1400 = vsel %vm1388, %v1382, %v1399
      %v1401 = vsel %vm1387, %v1398, %v1400
      %v1402 = vshll.u32 %v1362, 8
      %v1403 = vmul.u32.u64.compose %v1402, %v1401
      %v1404 = vextract.low.u32 %v1403
      %v1405 = vextract.high.u32 %v1403
      %v1406 = vmul.u32.u64.compose %v1402, %v1397
      %v1407 = vextract.low.u32 %v1406
      %v1408 = vextract.high.u32 %v1406
      %v1409 = vmul.u32 %v1402, %v1393
      %v1410 = vadd.s32 %v1405, %v1407
      %vm1411 = vc.u32 %v1405, %v1407
      %v1412 = vadd.s32 %v1408, 1
      %v1413 = vsel %vm1411, %v1412, %v1408
      %v1414 = vadd.s32 %v1409, %v1413
      %v1415 = vadd.s32 %v1414, 536870912
      %v1416 = vshrl.u32 %v1415, 30
      %v1417 = vshll.u32 %v1416, 30
      %v1418 = vsub.s32 %v1414, %v1417
      %vm1419 = vcmp.lt.s32.totalorder %v1418, 0
      %v1420 = vsub.s32 0, %v1418
      %v1421 = vsel %vm1419, %v1420, %v1418
      %v1422 = vclz %v1421
      %v1423 = vsub.s32 %v1422, 2
      %vm1424 = vcmp.gt.s32.totalorder 0, %v1423
      %v1425 = vsel %vm1424, 0, %v1423
      %v1426 = vsub.s32 32, %v1425
      %v1427 = vshll.u32 %v1418, %v1425
      %v1428 = vshrl.u32 %v1410, %v1426
      %v1429 = vor.u32 %v1427, %v1428
      %v1430 = vsub.s32 4294967266, %v1425
      %v1431 = vadd.s32 %v1430, 127
      %v1432 = vshll.u32 %v1431, 23
      %v1433 = vor.u32 4788187, %v1432
      %v1434 = vand.u32 2147483647, %v1433
      %v1436 = vcvt.s32.f32 %v1429
      %v1437 = vmul.f32 %v1436, %v1434
      %v1438 = vxor.u32 %v1437, 2147483648
      %v1439 = vsel %vm1356, %v1438, %v1437
      %v1440 = vsub.s32 4, %v1416
      %v1441 = vsel %vm1356, %v1440, %v1416
      %v1442 = vsel %vm1355, %v203, %v1439
      %v1443 = vsel %vm1355, 0, %v1441
      %v1444 = vcosq.f32.pop %v1442
      %v1445 = vsinq.f32.pop %v1442
      %vm1446 = vweird.f32 %v203
      %v1447 = vadd.s32 %v1443, 3
      %v1448 = vand.u32 %v1447, 3
      %vm1449 = vcmp.lt.s32.totalorder %v1448, 2
      %vm1450 = vcmp.eq.s32.totalorder %v1448, 0
      %v1451 = vxor.u32 %v1445, 2147483648
      %v1452 = vsel %vm1450, %v1444, %v1451
      %vm1453 = vcmp.eq.s32.totalorder %v1448, 2
      %v1454 = vxor.u32 %v1444, 2147483648
      %v1455 = vsel %vm1453, %v1454, %v1445
      %v1456 = vsel %vm1449, %v1452, %v1455
      %v1457 = vsel %vm1446, nan, %v1456
      %v1458 = vand.u32 2147483647, %v204
      %vm1459 = vcmp.le.f32.partialorder %v1458, 0.7853982
      %vm1460 = vcmp.lt.s32.totalorder %v204, 0
      %v1461 = vand.u32 %v204, 2139095040
      %v1462 = vshrl.u32 %v1461, 23
      %v1463 = vsub.s32 %v1462, 127
      %v1464 = vand.u32 2147483647, %v204
      %v1465 = vand.u32 %v1464, 8388607
      %v1466 = vor.u32 %v1465, 8388608
      %v1467 = vsub.s32 0, %v1466
      %v1468 = vadd.s32 %v1463, 1
      %vm1469 = vcmp.gt.s32.totalorder %v1468, 0
      %v1470 = vsel %vm1469, %v1468, 0
      %v1471 = vshrl.u32 %v1470, 5
      %v1472 = vand.u32 %v1470, 31
      %v1473 = vsub.s32 32, %v1472
      %v1474 = vshrl.u32 683565275, %v1473
      %v1475 = vshll.u32 683565275, %v1472
      %v1476 = vshrl.u32 2475754826, %v1473
      %v1477 = vor.u32 %v1475, %v1476
      %v1478 = vshll.u32 2475754826, %v1472
      %v1479 = vshrl.u32 2131351028, %v1473
      %v1480 = vor.u32 %v1478, %v1479
      %v1481 = vshll.u32 2131351028, %v1472
      %v1482 = vshrl.u32 2102212464, %v1473
      %v1483 = vor.u32 %v1481, %v1482
      %v1484 = vshll.u32 2102212464, %v1472
      %v1485 = vshrl.u32 920167782, %v1473
      %v1486 = vor.u32 %v1484, %v1485
      %v1487 = vshll.u32 920167782, %v1472
      %v1488 = vshrl.u32 1326507024, %v1473
      %v1489 = vor.u32 %v1487, %v1488
      %vm1490 = vcmp.lt.s32.totalorder %v1471, 1
      %vm1491 = vcmp.lt.s32.totalorder %v1471, 2
      %vm1492 = vcmp.lt.s32.totalorder %v1471, 3
      %vm1493 = vcmp.lt.s32.totalorder %v1471, 4
      %v1494 = vsel %vm1490, %v1474, %v1477
      %v1495 = vsel %vm1493, %v1483, 2102212464
      %v1496 = vsel %vm1492, %v1480, %v1495
      %v1497 = vsel %vm1491, %v1494, %v1496
      %v1498 = vsel %vm1490, %v1477, %v1480
      %v1499 = vsel %vm1493, %v1486, 920167782
      %v1500 = vsel %vm1492, %v1483, %v1499
      %v1501 = vsel %vm1491, %v1498, %v1500
      %v1502 = vsel %vm1490, %v1480, %v1483
      %v1503 = vsel %vm1493, %v1489, 1326507024
      %v1504 = vsel %vm1492, %v1486, %v1503
      %v1505 = vsel %vm1491, %v1502, %v1504
      %v1506 = vshll.u32 %v1466, 8
      %v1507 = vmul.u32.u64.compose %v1506, %v1505
      %v1508 = vextract.low.u32 %v1507
      %v1509 = vextract.high.u32 %v1507
      %v1510 = vmul.u32.u64.compose %v1506, %v1501
      %v1511 = vextract.low.u32 %v1510
      %v1512 = vextract.high.u32 %v1510
      %v1513 = vmul.u32 %v1506, %v1497
      %v1514 = vadd.s32 %v1509, %v1511
      %vm1515 = vc.u32 %v1509, %v1511
      %v1516 = vadd.s32 %v1512, 1
      %v1517 = vsel %vm1515, %v1516, %v1512
      %v1518 = vadd.s32 %v1513, %v1517
      %v1519 = vadd.s32 %v1518, 536870912
      %v1520 = vshrl.u32 %v1519, 30
      %v1521 = vshll.u32 %v1520, 30
      %v1522 = vsub.s32 %v1518, %v1521
      %vm1523 = vcmp.lt.s32.totalorder %v1522, 0
      %v1524 = vsub.s32 0, %v1522
      %v1525 = vsel %vm1523, %v1524, %v1522
      %v1526 = vclz %v1525
      %v1527 = vsub.s32 %v1526, 2
      %vm1528 = vcmp.gt.s32.totalorder 0, %v1527
      %v1529 = vsel %vm1528, 0, %v1527
      %v1530 = vsub.s32 32, %v1529
      %v1531 = vshll.u32 %v1522, %v1529
      %v1532 = vshrl.u32 %v1514, %v1530
      %v1533 = vor.u32 %v1531, %v1532
      %v1534 = vsub.s32 4294967266, %v1529
      %v1535 = vadd.s32 %v1534, 127
      %v1536 = vshll.u32 %v1535, 23
      %v1537 = vor.u32 4788187, %v1536
      %v1538 = vand.u32 2147483647, %v1537
      %v1540 = vcvt.s32.f32 %v1533
      %v1541 = vmul.f32 %v1540, %v1538
      %v1542 = vxor.u32 %v1541, 2147483648
      %v1543 = vsel %vm1460, %v1542, %v1541
      %v1544 = vsub.s32 4, %v1520
      %v1545 = vsel %vm1460, %v1544, %v1520
      %v1546 = vsel %vm1459, %v204, %v1543
      %v1547 = vsel %vm1459, 0, %v1545
      %v1548 = vcosq.f32.pop %v1546
      %v1549 = vsinq.f32.pop %v1546
      %vm1550 = vweird.f32 %v204
      %v1551 = vadd.s32 %v1547, 3
      %v1552 = vand.u32 %v1551, 3
      %vm1553 = vcmp.lt.s32.totalorder %v1552, 2
      %vm1554 = vcmp.eq.s32.totalorder %v1552, 0
      %v1555 = vxor.u32 %v1549, 2147483648
      %v1556 = vsel %vm1554, %v1548, %v1555
      %vm1557 = vcmp.eq.s32.totalorder %v1552, 2
      %v1558 = vxor.u32 %v1548, 2147483648
      %v1559 = vsel %vm1557, %v1558, %v1549
      %v1560 = vsel %vm1553, %v1556, %v1559
      %v1561 = vsel %vm1550, nan, %v1560
      %v1562 = vand.u32 2147483647, %v205
      %vm1563 = vcmp.le.f32.partialorder %v1562, 0.7853982
      %vm1564 = vcmp.lt.s32.totalorder %v205, 0
      %v1565 = vand.u32 %v205, 2139095040
      %v1566 = vshrl.u32 %v1565, 23
      %v1567 = vsub.s32 %v1566, 127
      %v1568 = vand.u32 2147483647, %v205
      %v1569 = vand.u32 %v1568, 8388607
      %v1570 = vor.u32 %v1569, 8388608
      %v1571 = vsub.s32 0, %v1570
      %v1572 = vadd.s32 %v1567, 1
      %vm1573 = vcmp.gt.s32.totalorder %v1572, 0
      %v1574 = vsel %vm1573, %v1572, 0
      %v1575 = vshrl.u32 %v1574, 5
      %v1576 = vand.u32 %v1574, 31
      %v1577 = vsub.s32 32, %v1576
      %v1578 = vshrl.u32 683565275, %v1577
      %v1579 = vshll.u32 683565275, %v1576
      %v1580 = vshrl.u32 2475754826, %v1577
      %v1581 = vor.u32 %v1579, %v1580
      %v1582 = vshll.u32 2475754826, %v1576
      %v1583 = vshrl.u32 2131351028, %v1577
      %v1584 = vor.u32 %v1582, %v1583
      %v1585 = vshll.u32 2131351028, %v1576
      %v1586 = vshrl.u32 2102212464, %v1577
      %v1587 = vor.u32 %v1585, %v1586
      %v1588 = vshll.u32 2102212464, %v1576
      %v1589 = vshrl.u32 920167782, %v1577
      %v1590 = vor.u32 %v1588, %v1589
      %v1591 = vshll.u32 920167782, %v1576
      %v1592 = vshrl.u32 1326507024, %v1577
      %v1593 = vor.u32 %v1591, %v1592
      %vm1594 = vcmp.lt.s32.totalorder %v1575, 1
      %vm1595 = vcmp.lt.s32.totalorder %v1575, 2
      %vm1596 = vcmp.lt.s32.totalorder %v1575, 3
      %vm1597 = vcmp.lt.s32.totalorder %v1575, 4
      %v1598 = vsel %vm1594, %v1578, %v1581
      %v1599 = vsel %vm1597, %v1587, 2102212464
      %v1600 = vsel %vm1596, %v1584, %v1599
      %v1601 = vsel %vm1595, %v1598, %v1600
      %v1602 = vsel %vm1594, %v1581, %v1584
      %v1603 = vsel %vm1597, %v1590, 920167782
      %v1604 = vsel %vm1596, %v1587, %v1603
      %v1605 = vsel %vm1595, %v1602, %v1604
      %v1606 = vsel %vm1594, %v1584, %v1587
      %v1607 = vsel %vm1597, %v1593, 1326507024
      %v1608 = vsel %vm1596, %v1590, %v1607
      %v1609 = vsel %vm1595, %v1606, %v1608
      %v1610 = vshll.u32 %v1570, 8
      %v1611 = vmul.u32.u64.compose %v1610, %v1609
      %v1612 = vextract.low.u32 %v1611
      %v1613 = vextract.high.u32 %v1611
      %v1614 = vmul.u32.u64.compose %v1610, %v1605
      %v1615 = vextract.low.u32 %v1614
      %v1616 = vextract.high.u32 %v1614
      %v1617 = vmul.u32 %v1610, %v1601
      %v1618 = vadd.s32 %v1613, %v1615
      %vm1619 = vc.u32 %v1613, %v1615
      %v1620 = vadd.s32 %v1616, 1
      %v1621 = vsel %vm1619, %v1620, %v1616
      %v1622 = vadd.s32 %v1617, %v1621
      %v1623 = vadd.s32 %v1622, 536870912
      %v1624 = vshrl.u32 %v1623, 30
      %v1625 = vshll.u32 %v1624, 30
      %v1626 = vsub.s32 %v1622, %v1625
      %vm1627 = vcmp.lt.s32.totalorder %v1626, 0
      %v1628 = vsub.s32 0, %v1626
      %v1629 = vsel %vm1627, %v1628, %v1626
      %v1630 = vclz %v1629
      %v1631 = vsub.s32 %v1630, 2
      %vm1632 = vcmp.gt.s32.totalorder 0, %v1631
      %v1633 = vsel %vm1632, 0, %v1631
      %v1634 = vsub.s32 32, %v1633
      %v1635 = vshll.u32 %v1626, %v1633
      %v1636 = vshrl.u32 %v1618, %v1634
      %v1637 = vor.u32 %v1635, %v1636
      %v1638 = vsub.s32 4294967266, %v1633
      %v1639 = vadd.s32 %v1638, 127
      %v1640 = vshll.u32 %v1639, 23
      %v1641 = vor.u32 4788187, %v1640
      %v1642 = vand.u32 2147483647, %v1641
      %v1644 = vcvt.s32.f32 %v1637
      %v1645 = vmul.f32 %v1644, %v1642
      %v1646 = vxor.u32 %v1645, 2147483648
      %v1647 = vsel %vm1564, %v1646, %v1645
      %v1648 = vsub.s32 4, %v1624
      %v1649 = vsel %vm1564, %v1648, %v1624
      %v1650 = vsel %vm1563, %v205, %v1647
      %v1651 = vsel %vm1563, 0, %v1649
      %v1652 = vcosq.f32.pop %v1650
      %v1653 = vsinq.f32.pop %v1650
      %vm1654 = vweird.f32 %v205
      %v1655 = vadd.s32 %v1651, 3
      %v1656 = vand.u32 %v1655, 3
      %vm1657 = vcmp.lt.s32.totalorder %v1656, 2
      %vm1658 = vcmp.eq.s32.totalorder %v1656, 0
      %v1659 = vxor.u32 %v1653, 2147483648
      %v1660 = vsel %vm1658, %v1652, %v1659
      %vm1661 = vcmp.eq.s32.totalorder %v1656, 2
      %v1662 = vxor.u32 %v1652, 2147483648
      %v1663 = vsel %vm1661, %v1662, %v1653
      %v1664 = vsel %vm1657, %v1660, %v1663
      %v1665 = vsel %vm1654, nan, %v1664
      %v1666 = vand.u32 2147483647, %v206
      %vm1667 = vcmp.le.f32.partialorder %v1666, 0.7853982
      %vm1668 = vcmp.lt.s32.totalorder %v206, 0
      %v1669 = vand.u32 %v206, 2139095040
      %v1670 = vshrl.u32 %v1669, 23
      %v1671 = vsub.s32 %v1670, 127
      %v1672 = vand.u32 2147483647, %v206
      %v1673 = vand.u32 %v1672, 8388607
      %v1674 = vor.u32 %v1673, 8388608
      %v1675 = vsub.s32 0, %v1674
      %v1676 = vadd.s32 %v1671, 1
      %vm1677 = vcmp.gt.s32.totalorder %v1676, 0
      %v1678 = vsel %vm1677, %v1676, 0
      %v1679 = vshrl.u32 %v1678, 5
      %v1680 = vand.u32 %v1678, 31
      %v1681 = vsub.s32 32, %v1680
      %v1682 = vshrl.u32 683565275, %v1681
      %v1683 = vshll.u32 683565275, %v1680
      %v1684 = vshrl.u32 2475754826, %v1681
      %v1685 = vor.u32 %v1683, %v1684
      %v1686 = vshll.u32 2475754826, %v1680
      %v1687 = vshrl.u32 2131351028, %v1681
      %v1688 = vor.u32 %v1686, %v1687
      %v1689 = vshll.u32 2131351028, %v1680
      %v1690 = vshrl.u32 2102212464, %v1681
      %v1691 = vor.u32 %v1689, %v1690
      %v1692 = vshll.u32 2102212464, %v1680
      %v1693 = vshrl.u32 920167782, %v1681
      %v1694 = vor.u32 %v1692, %v1693
      %v1695 = vshll.u32 920167782, %v1680
      %v1696 = vshrl.u32 1326507024, %v1681
      %v1697 = vor.u32 %v1695, %v1696
      %vm1698 = vcmp.lt.s32.totalorder %v1679, 1
      %vm1699 = vcmp.lt.s32.totalorder %v1679, 2
      %vm1700 = vcmp.lt.s32.totalorder %v1679, 3
      %vm1701 = vcmp.lt.s32.totalorder %v1679, 4
      %v1702 = vsel %vm1698, %v1682, %v1685
      %v1703 = vsel %vm1701, %v1691, 2102212464
      %v1704 = vsel %vm1700, %v1688, %v1703
      %v1705 = vsel %vm1699, %v1702, %v1704
      %v1706 = vsel %vm1698, %v1685, %v1688
      %v1707 = vsel %vm1701, %v1694, 920167782
      %v1708 = vsel %vm1700, %v1691, %v1707
      %v1709 = vsel %vm1699, %v1706, %v1708
      %v1710 = vsel %vm1698, %v1688, %v1691
      %v1711 = vsel %vm1701, %v1697, 1326507024
      %v1712 = vsel %vm1700, %v1694, %v1711
      %v1713 = vsel %vm1699, %v1710, %v1712
      %v1714 = vshll.u32 %v1674, 8
      %v1715 = vmul.u32.u64.compose %v1714, %v1713
      %v1716 = vextract.low.u32 %v1715
      %v1717 = vextract.high.u32 %v1715
      %v1718 = vmul.u32.u64.compose %v1714, %v1709
      %v1719 = vextract.low.u32 %v1718
      %v1720 = vextract.high.u32 %v1718
      %v1721 = vmul.u32 %v1714, %v1705
      %v1722 = vadd.s32 %v1717, %v1719
      %vm1723 = vc.u32 %v1717, %v1719
      %v1724 = vadd.s32 %v1720, 1
      %v1725 = vsel %vm1723, %v1724, %v1720
      %v1726 = vadd.s32 %v1721, %v1725
      %v1727 = vadd.s32 %v1726, 536870912
      %v1728 = vshrl.u32 %v1727, 30
      %v1729 = vshll.u32 %v1728, 30
      %v1730 = vsub.s32 %v1726, %v1729
      %vm1731 = vcmp.lt.s32.totalorder %v1730, 0
      %v1732 = vsub.s32 0, %v1730
      %v1733 = vsel %vm1731, %v1732, %v1730
      %v1734 = vclz %v1733
      %v1735 = vsub.s32 %v1734, 2
      %vm1736 = vcmp.gt.s32.totalorder 0, %v1735
      %v1737 = vsel %vm1736, 0, %v1735
      %v1738 = vsub.s32 32, %v1737
      %v1739 = vshll.u32 %v1730, %v1737
      %v1740 = vshrl.u32 %v1722, %v1738
      %v1741 = vor.u32 %v1739, %v1740
      %v1742 = vsub.s32 4294967266, %v1737
      %v1743 = vadd.s32 %v1742, 127
      %v1744 = vshll.u32 %v1743, 23
      %v1745 = vor.u32 4788187, %v1744
      %v1746 = vand.u32 2147483647, %v1745
      %v1748 = vcvt.s32.f32 %v1741
      %v1749 = vmul.f32 %v1748, %v1746
      %v1750 = vxor.u32 %v1749, 2147483648
      %v1751 = vsel %vm1668, %v1750, %v1749
      %v1752 = vsub.s32 4, %v1728
      %v1753 = vsel %vm1668, %v1752, %v1728
      %v1754 = vsel %vm1667, %v206, %v1751
      %v1755 = vsel %vm1667, 0, %v1753
      %v1756 = vcosq.f32.pop %v1754
      %v1757 = vsinq.f32.pop %v1754
      %vm1758 = vweird.f32 %v206
      %v1759 = vadd.s32 %v1755, 3
      %v1760 = vand.u32 %v1759, 3
      %vm1761 = vcmp.lt.s32.totalorder %v1760, 2
      %vm1762 = vcmp.eq.s32.totalorder %v1760, 0
      %v1763 = vxor.u32 %v1757, 2147483648
      %v1764 = vsel %vm1762, %v1756, %v1763
      %vm1765 = vcmp.eq.s32.totalorder %v1760, 2
      %v1766 = vxor.u32 %v1756, 2147483648
      %v1767 = vsel %vm1765, %v1766, %v1757
      %v1768 = vsel %vm1761, %v1764, %v1767
      %v1769 = vsel %vm1758, nan, %v1768
      %v1770 = vand.u32 2147483647, %v207
      %vm1771 = vcmp.le.f32.partialorder %v1770, 0.7853982
      %vm1772 = vcmp.lt.s32.totalorder %v207, 0
      %v1773 = vand.u32 %v207, 2139095040
      %v1774 = vshrl.u32 %v1773, 23
      %v1775 = vsub.s32 %v1774, 127
      %v1776 = vand.u32 2147483647, %v207
      %v1777 = vand.u32 %v1776, 8388607
      %v1778 = vor.u32 %v1777, 8388608
      %v1779 = vsub.s32 0, %v1778
      %v1780 = vadd.s32 %v1775, 1
      %vm1781 = vcmp.gt.s32.totalorder %v1780, 0
      %v1782 = vsel %vm1781, %v1780, 0
      %v1783 = vshrl.u32 %v1782, 5
      %v1784 = vand.u32 %v1782, 31
      %v1785 = vsub.s32 32, %v1784
      %v1786 = vshrl.u32 683565275, %v1785
      %v1787 = vshll.u32 683565275, %v1784
      %v1788 = vshrl.u32 2475754826, %v1785
      %v1789 = vor.u32 %v1787, %v1788
      %v1790 = vshll.u32 2475754826, %v1784
      %v1791 = vshrl.u32 2131351028, %v1785
      %v1792 = vor.u32 %v1790, %v1791
      %v1793 = vshll.u32 2131351028, %v1784
      %v1794 = vshrl.u32 2102212464, %v1785
      %v1795 = vor.u32 %v1793, %v1794
      %v1796 = vshll.u32 2102212464, %v1784
      %v1797 = vshrl.u32 920167782, %v1785
      %v1798 = vor.u32 %v1796, %v1797
      %v1799 = vshll.u32 920167782, %v1784
      %v1800 = vshrl.u32 1326507024, %v1785
      %v1801 = vor.u32 %v1799, %v1800
      %vm1802 = vcmp.lt.s32.totalorder %v1783, 1
      %vm1803 = vcmp.lt.s32.totalorder %v1783, 2
      %vm1804 = vcmp.lt.s32.totalorder %v1783, 3
      %vm1805 = vcmp.lt.s32.totalorder %v1783, 4
      %v1806 = vsel %vm1802, %v1786, %v1789
      %v1807 = vsel %vm1805, %v1795, 2102212464
      %v1808 = vsel %vm1804, %v1792, %v1807
      %v1809 = vsel %vm1803, %v1806, %v1808
      %v1810 = vsel %vm1802, %v1789, %v1792
      %v1811 = vsel %vm1805, %v1798, 920167782
      %v1812 = vsel %vm1804, %v1795, %v1811
      %v1813 = vsel %vm1803, %v1810, %v1812
      %v1814 = vsel %vm1802, %v1792, %v1795
      %v1815 = vsel %vm1805, %v1801, 1326507024
      %v1816 = vsel %vm1804, %v1798, %v1815
      %v1817 = vsel %vm1803, %v1814, %v1816
      %v1818 = vshll.u32 %v1778, 8
      %v1819 = vmul.u32.u64.compose %v1818, %v1817
      %v1820 = vextract.low.u32 %v1819
      %v1821 = vextract.high.u32 %v1819
      %v1822 = vmul.u32.u64.compose %v1818, %v1813
      %v1823 = vextract.low.u32 %v1822
      %v1824 = vextract.high.u32 %v1822
      %v1825 = vmul.u32 %v1818, %v1809
      %v1826 = vadd.s32 %v1821, %v1823
      %vm1827 = vc.u32 %v1821, %v1823
      %v1828 = vadd.s32 %v1824, 1
      %v1829 = vsel %vm1827, %v1828, %v1824
      %v1830 = vadd.s32 %v1825, %v1829
      %v1831 = vadd.s32 %v1830, 536870912
      %v1832 = vshrl.u32 %v1831, 30
      %v1833 = vshll.u32 %v1832, 30
      %v1834 = vsub.s32 %v1830, %v1833
      %vm1835 = vcmp.lt.s32.totalorder %v1834, 0
      %v1836 = vsub.s32 0, %v1834
      %v1837 = vsel %vm1835, %v1836, %v1834
      %v1838 = vclz %v1837
      %v1839 = vsub.s32 %v1838, 2
      %vm1840 = vcmp.gt.s32.totalorder 0, %v1839
      %v1841 = vsel %vm1840, 0, %v1839
      %v1842 = vsub.s32 32, %v1841
      %v1843 = vshll.u32 %v1834, %v1841
      %v1844 = vshrl.u32 %v1826, %v1842
      %v1845 = vor.u32 %v1843, %v1844
      %v1846 = vsub.s32 4294967266, %v1841
      %v1847 = vadd.s32 %v1846, 127
      %v1848 = vshll.u32 %v1847, 23
      %v1849 = vor.u32 4788187, %v1848
      %v1850 = vand.u32 2147483647, %v1849
      %v1852 = vcvt.s32.f32 %v1845
      %v1853 = vmul.f32 %v1852, %v1850
      %v1854 = vxor.u32 %v1853, 2147483648
      %v1855 = vsel %vm1772, %v1854, %v1853
      %v1856 = vsub.s32 4, %v1832
      %v1857 = vsel %vm1772, %v1856, %v1832
      %v1858 = vsel %vm1771, %v207, %v1855
      %v1859 = vsel %vm1771, 0, %v1857
      %v1860 = vcosq.f32.pop %v1858
      %v1861 = vsinq.f32.pop %v1858
      %vm1862 = vweird.f32 %v207
      %v1863 = vadd.s32 %v1859, 3
      %v1864 = vand.u32 %v1863, 3
      %vm1865 = vcmp.lt.s32.totalorder %v1864, 2
      %vm1866 = vcmp.eq.s32.totalorder %v1864, 0
      %v1867 = vxor.u32 %v1861, 2147483648
      %v1868 = vsel %vm1866, %v1860, %v1867
      %vm1869 = vcmp.eq.s32.totalorder %v1864, 2
      %v1870 = vxor.u32 %v1860, 2147483648
      %v1871 = vsel %vm1869, %v1870, %v1861
      %v1872 = vsel %vm1865, %v1868, %v1871
      %v1873 = vsel %vm1862, nan, %v1872
      %v1874 = vand.u32 2147483647, %v208
      %vm1875 = vcmp.le.f32.partialorder %v1874, 0.7853982
      %vm1876 = vcmp.lt.s32.totalorder %v208, 0
      %v1877 = vand.u32 %v208, 2139095040
      %v1878 = vshrl.u32 %v1877, 23
      %v1879 = vsub.s32 %v1878, 127
      %v1880 = vand.u32 2147483647, %v208
      %v1881 = vand.u32 %v1880, 8388607
      %v1882 = vor.u32 %v1881, 8388608
      %v1883 = vsub.s32 0, %v1882
      %v1884 = vadd.s32 %v1879, 1
      %vm1885 = vcmp.gt.s32.totalorder %v1884, 0
      %v1886 = vsel %vm1885, %v1884, 0
      %v1887 = vshrl.u32 %v1886, 5
      %v1888 = vand.u32 %v1886, 31
      %v1889 = vsub.s32 32, %v1888
      %v1890 = vshrl.u32 683565275, %v1889
      %v1891 = vshll.u32 683565275, %v1888
      %v1892 = vshrl.u32 2475754826, %v1889
      %v1893 = vor.u32 %v1891, %v1892
      %v1894 = vshll.u32 2475754826, %v1888
      %v1895 = vshrl.u32 2131351028, %v1889
      %v1896 = vor.u32 %v1894, %v1895
      %v1897 = vshll.u32 2131351028, %v1888
      %v1898 = vshrl.u32 2102212464, %v1889
      %v1899 = vor.u32 %v1897, %v1898
      %v1900 = vshll.u32 2102212464, %v1888
      %v1901 = vshrl.u32 920167782, %v1889
      %v1902 = vor.u32 %v1900, %v1901
      %v1903 = vshll.u32 920167782, %v1888
      %v1904 = vshrl.u32 1326507024, %v1889
      %v1905 = vor.u32 %v1903, %v1904
      %vm1906 = vcmp.lt.s32.totalorder %v1887, 1
      %vm1907 = vcmp.lt.s32.totalorder %v1887, 2
      %vm1908 = vcmp.lt.s32.totalorder %v1887, 3
      %vm1909 = vcmp.lt.s32.totalorder %v1887, 4
      %v1910 = vsel %vm1906, %v1890, %v1893
      %v1911 = vsel %vm1909, %v1899, 2102212464
      %v1912 = vsel %vm1908, %v1896, %v1911
      %v1913 = vsel %vm1907, %v1910, %v1912
      %v1914 = vsel %vm1906, %v1893, %v1896
      %v1915 = vsel %vm1909, %v1902, 920167782
      %v1916 = vsel %vm1908, %v1899, %v1915
      %v1917 = vsel %vm1907, %v1914, %v1916
      %v1918 = vsel %vm1906, %v1896, %v1899
      %v1919 = vsel %vm1909, %v1905, 1326507024
      %v1920 = vsel %vm1908, %v1902, %v1919
      %v1921 = vsel %vm1907, %v1918, %v1920
      %v1922 = vshll.u32 %v1882, 8
      %v1923 = vmul.u32.u64.compose %v1922, %v1921
      %v1924 = vextract.low.u32 %v1923
      %v1925 = vextract.high.u32 %v1923
      %v1926 = vmul.u32.u64.compose %v1922, %v1917
      %v1927 = vextract.low.u32 %v1926
      %v1928 = vextract.high.u32 %v1926
      %v1929 = vmul.u32 %v1922, %v1913
      %v1930 = vadd.s32 %v1925, %v1927
      %vm1931 = vc.u32 %v1925, %v1927
      %v1932 = vadd.s32 %v1928, 1
      %v1933 = vsel %vm1931, %v1932, %v1928
      %v1934 = vadd.s32 %v1929, %v1933
      %v1935 = vadd.s32 %v1934, 536870912
      %v1936 = vshrl.u32 %v1935, 30
      %v1937 = vshll.u32 %v1936, 30
      %v1938 = vsub.s32 %v1934, %v1937
      %vm1939 = vcmp.lt.s32.totalorder %v1938, 0
      %v1940 = vsub.s32 0, %v1938
      %v1941 = vsel %vm1939, %v1940, %v1938
      %v1942 = vclz %v1941
      %v1943 = vsub.s32 %v1942, 2
      %vm1944 = vcmp.gt.s32.totalorder 0, %v1943
      %v1945 = vsel %vm1944, 0, %v1943
      %v1946 = vsub.s32 32, %v1945
      %v1947 = vshll.u32 %v1938, %v1945
      %v1948 = vshrl.u32 %v1930, %v1946
      %v1949 = vor.u32 %v1947, %v1948
      %v1950 = vsub.s32 4294967266, %v1945
      %v1951 = vadd.s32 %v1950, 127
      %v1952 = vshll.u32 %v1951, 23
      %v1953 = vor.u32 4788187, %v1952
      %v1954 = vand.u32 2147483647, %v1953
      %v1956 = vcvt.s32.f32 %v1949
      %v1957 = vmul.f32 %v1956, %v1954
      %v1958 = vxor.u32 %v1957, 2147483648
      %v1959 = vsel %vm1876, %v1958, %v1957
      %v1960 = vsub.s32 4, %v1936
      %v1961 = vsel %vm1876, %v1960, %v1936
      %v1962 = vsel %vm1875, %v208, %v1959
      %v1963 = vsel %vm1875, 0, %v1961
      %v1964 = vcosq.f32.pop %v1962
      %v1965 = vsinq.f32.pop %v1962
      %vm1966 = vweird.f32 %v208
      %v1967 = vadd.s32 %v1963, 3
      %v1968 = vand.u32 %v1967, 3
      %vm1969 = vcmp.lt.s32.totalorder %v1968, 2
      %vm1970 = vcmp.eq.s32.totalorder %v1968, 0
      %v1971 = vxor.u32 %v1965, 2147483648
      %v1972 = vsel %vm1970, %v1964, %v1971
      %vm1973 = vcmp.eq.s32.totalorder %v1968, 2
      %v1974 = vxor.u32 %v1964, 2147483648
      %v1975 = vsel %vm1973, %v1974, %v1965
      %v1976 = vsel %vm1969, %v1972, %v1975
      %v1977 = vsel %vm1966, nan, %v1976
      %v1978 = vand.u32 2147483647, %v209
      %vm1979 = vcmp.le.f32.partialorder %v1978, 0.7853982
      %vm1980 = vcmp.lt.s32.totalorder %v209, 0
      %v1981 = vand.u32 %v209, 2139095040
      %v1982 = vshrl.u32 %v1981, 23
      %v1983 = vsub.s32 %v1982, 127
      %v1984 = vand.u32 2147483647, %v209
      %v1985 = vand.u32 %v1984, 8388607
      %v1986 = vor.u32 %v1985, 8388608
      %v1987 = vsub.s32 0, %v1986
      %v1988 = vadd.s32 %v1983, 1
      %vm1989 = vcmp.gt.s32.totalorder %v1988, 0
      %v1990 = vsel %vm1989, %v1988, 0
      %v1991 = vshrl.u32 %v1990, 5
      %v1992 = vand.u32 %v1990, 31
      %v1993 = vsub.s32 32, %v1992
      %v1994 = vshrl.u32 683565275, %v1993
      %v1995 = vshll.u32 683565275, %v1992
      %v1996 = vshrl.u32 2475754826, %v1993
      %v1997 = vor.u32 %v1995, %v1996
      %v1998 = vshll.u32 2475754826, %v1992
      %v1999 = vshrl.u32 2131351028, %v1993
      %v2000 = vor.u32 %v1998, %v1999
      %v2001 = vshll.u32 2131351028, %v1992
      %v2002 = vshrl.u32 2102212464, %v1993
      %v2003 = vor.u32 %v2001, %v2002
      %v2004 = vshll.u32 2102212464, %v1992
      %v2005 = vshrl.u32 920167782, %v1993
      %v2006 = vor.u32 %v2004, %v2005
      %v2007 = vshll.u32 920167782, %v1992
      %v2008 = vshrl.u32 1326507024, %v1993
      %v2009 = vor.u32 %v2007, %v2008
      %vm2010 = vcmp.lt.s32.totalorder %v1991, 1
      %vm2011 = vcmp.lt.s32.totalorder %v1991, 2
      %vm2012 = vcmp.lt.s32.totalorder %v1991, 3
      %vm2013 = vcmp.lt.s32.totalorder %v1991, 4
      %v2014 = vsel %vm2010, %v1994, %v1997
      %v2015 = vsel %vm2013, %v2003, 2102212464
      %v2016 = vsel %vm2012, %v2000, %v2015
      %v2017 = vsel %vm2011, %v2014, %v2016
      %v2018 = vsel %vm2010, %v1997, %v2000
      %v2019 = vsel %vm2013, %v2006, 920167782
      %v2020 = vsel %vm2012, %v2003, %v2019
      %v2021 = vsel %vm2011, %v2018, %v2020
      %v2022 = vsel %vm2010, %v2000, %v2003
      %v2023 = vsel %vm2013, %v2009, 1326507024
      %v2024 = vsel %vm2012, %v2006, %v2023
      %v2025 = vsel %vm2011, %v2022, %v2024
      %v2026 = vshll.u32 %v1986, 8
      %v2027 = vmul.u32.u64.compose %v2026, %v2025
      %v2028 = vextract.low.u32 %v2027
      %v2029 = vextract.high.u32 %v2027
      %v2030 = vmul.u32.u64.compose %v2026, %v2021
      %v2031 = vextract.low.u32 %v2030
      %v2032 = vextract.high.u32 %v2030
      %v2033 = vmul.u32 %v2026, %v2017
      %v2034 = vadd.s32 %v2029, %v2031
      %vm2035 = vc.u32 %v2029, %v2031
      %v2036 = vadd.s32 %v2032, 1
      %v2037 = vsel %vm2035, %v2036, %v2032
      %v2038 = vadd.s32 %v2033, %v2037
      %v2039 = vadd.s32 %v2038, 536870912
      %v2040 = vshrl.u32 %v2039, 30
      %v2041 = vshll.u32 %v2040, 30
      %v2042 = vsub.s32 %v2038, %v2041
      %vm2043 = vcmp.lt.s32.totalorder %v2042, 0
      %v2044 = vsub.s32 0, %v2042
      %v2045 = vsel %vm2043, %v2044, %v2042
      %v2046 = vclz %v2045
      %v2047 = vsub.s32 %v2046, 2
      %vm2048 = vcmp.gt.s32.totalorder 0, %v2047
      %v2049 = vsel %vm2048, 0, %v2047
      %v2050 = vsub.s32 32, %v2049
      %v2051 = vshll.u32 %v2042, %v2049
      %v2052 = vshrl.u32 %v2034, %v2050
      %v2053 = vor.u32 %v2051, %v2052
      %v2054 = vsub.s32 4294967266, %v2049
      %v2055 = vadd.s32 %v2054, 127
      %v2056 = vshll.u32 %v2055, 23
      %v2057 = vor.u32 4788187, %v2056
      %v2058 = vand.u32 2147483647, %v2057
      %v2060 = vcvt.s32.f32 %v2053
      %v2061 = vmul.f32 %v2060, %v2058
      %v2062 = vxor.u32 %v2061, 2147483648
      %v2063 = vsel %vm1980, %v2062, %v2061
      %v2064 = vsub.s32 4, %v2040
      %v2065 = vsel %vm1980, %v2064, %v2040
      %v2066 = vsel %vm1979, %v209, %v2063
      %v2067 = vsel %vm1979, 0, %v2065
      %v2068 = vcosq.f32.pop %v2066
      %v2069 = vsinq.f32.pop %v2066
      %vm2070 = vweird.f32 %v209
      %v2071 = vadd.s32 %v2067, 3
      %v2072 = vand.u32 %v2071, 3
      %vm2073 = vcmp.lt.s32.totalorder %v2072, 2
      %vm2074 = vcmp.eq.s32.totalorder %v2072, 0
      %v2075 = vxor.u32 %v2069, 2147483648
      %v2076 = vsel %vm2074, %v2068, %v2075
      %vm2077 = vcmp.eq.s32.totalorder %v2072, 2
      %v2078 = vxor.u32 %v2068, 2147483648
      %v2079 = vsel %vm2077, %v2078, %v2069
      %v2080 = vsel %vm2073, %v2076, %v2079
      %v2081 = vsel %vm2070, nan, %v2080
      %v2082 = vmul.f32 %v192, %v1249
      %v2083 = vmul.f32 %v193, %v1353
      %v2084 = vmul.f32 %v194, %v1457
      %v2085 = vmul.f32 %v195, %v1561
      %v2086 = vmul.f32 %v196, %v1665
      %v2087 = vmul.f32 %v197, %v1769
      %v2088 = vmul.f32 %v198, %v1873
      %v2089 = vmul.f32 %v199, %v1977
      %v2090 = vmul.f32 %v200, %v2081
      %vm2091 = vcmask 1040384
      %v2092 = vsel %vm2091, %v1145, 0.0
      %v2093 = vsel %vm2091, %v2090, 0.0
      %v2094 = vpack.c.bf16 %v1138, %v1137
      %v2095 = vpack.c.bf16 %v1140, %v1139
      %v2096 = vpack.c.bf16 %v1142, %v1141
      %v2097 = vpack.c.bf16 %v1144, %v1143
      %v2098 = vpack.c.bf16 %v2082, %v2092
      %v2099 = vpack.c.bf16 %v2084, %v2083
      %v2100 = vpack.c.bf16 %v2086, %v2085
      %v2101 = vpack.c.bf16 %v2088, %v2087
      %v2102 = vpack.c.bf16 %v2093, %v2089
      %v2103 = vunpack.c.l.bf16 %v2094
      %v2104 = vunpack.c.h.bf16 %v2094
      %v2105 = vunpack.c.l.bf16 %v2095
      %v2106 = vunpack.c.h.bf16 %v2095
      %v2107 = vunpack.c.l.bf16 %v2096
      %v2108 = vunpack.c.h.bf16 %v2096
      %v2109 = vunpack.c.l.bf16 %v2097
      %v2110 = vunpack.c.h.bf16 %v2097
      %v2111 = vunpack.c.l.bf16 %v2098
      %v2112 = vunpack.c.h.bf16 %v2098
      %v2113 = vunpack.c.l.bf16 %v2099
      %v2114 = vunpack.c.h.bf16 %v2099
      %v2115 = vunpack.c.l.bf16 %v2100
      %v2116 = vunpack.c.h.bf16 %v2100
      %v2117 = vunpack.c.l.bf16 %v2101
      %v2118 = vunpack.c.h.bf16 %v2101
      %v2119 = vunpack.c.l.bf16 %v2102
      %v2120 = vunpack.c.h.bf16 %v2102
      %v2121 = vsub.f32 %v1137, %v2103
      %v2122 = vsub.f32 %v1138, %v2104
      %v2123 = vsub.f32 %v1139, %v2105
      %v2124 = vsub.f32 %v1140, %v2106
      %v2125 = vsub.f32 %v1141, %v2107
      %v2126 = vsub.f32 %v1142, %v2108
      %v2127 = vsub.f32 %v1143, %v2109
      %v2128 = vsub.f32 %v1144, %v2110
      %v2129 = vsub.f32 %v2092, %v2111
      %v2130 = vsub.f32 %v2082, %v2112
      %v2131 = vsub.f32 %v2083, %v2113
      %v2132 = vsub.f32 %v2084, %v2114
      %v2133 = vsub.f32 %v2085, %v2115
      %v2134 = vsub.f32 %v2086, %v2116
      %v2135 = vsub.f32 %v2087, %v2117
      %v2136 = vsub.f32 %v2088, %v2118
      %v2137 = vsub.f32 %v2089, %v2119
      %v2138 = vsub.f32 %v2093, %v2120
      %v2139 = vpack.c.bf16 %v2122, %v2121
      %v2140 = vpack.c.bf16 %v2124, %v2123
      %v2141 = vpack.c.bf16 %v2126, %v2125
      %v2142 = vpack.c.bf16 %v2128, %v2127
      %v2143 = vpack.c.bf16 %v2130, %v2129
      %v2144 = vpack.c.bf16 %v2132, %v2131
      %v2145 = vpack.c.bf16 %v2134, %v2133
      %v2146 = vpack.c.bf16 %v2136, %v2135
      %v2147 = vpack.c.bf16 %v2138, %v2137
      %v2148 = vld [vmem:[%s2] sm:$0xf]
      %v2149 = vld [vmem:[%s2 + $0x4] sm:$0xf]
      %v2150 = vld [vmem:[%s2 + $0x8] sm:$0xf]
      %v2151 = vld [vmem:[%s2 + $0xc] sm:$0xf]
      %v2152 = vld [vmem:[%s2 + $0x10] sm:$0xf]
      %v2153 = vld [vmem:[%s2 + $0x14] sm:$0xf]
      %v2154 = vld [vmem:[%s2 + $0x18] sm:$0xf]
      %v2155 = vld [vmem:[%s2 + $0x1c] sm:$0xf]
      %v2156 = vld [vmem:[%s2 + $0x20] sm:$0xf]
      %v2157 = vld [vmem:[%s2 + $0x24] sm:$0xf]
      %v2158 = vld [vmem:[%s2 + $0x28] sm:$0xf]
      %v2159 = vld [vmem:[%s2 + $0x2c] sm:$0xf]
      %v2160 = vld [vmem:[%s2 + $0x30] sm:$0xf]
      %v2161 = vld [vmem:[%s2 + $0x34] sm:$0xf]
      %v2162 = vld [vmem:[%s2 + $0x38] sm:$0xf]
      %v2163 = vld [vmem:[%s2 + $0x3c] sm:$0xf]
      %v2164 = vld [vmem:[%s2 + $0x40] sm:$0xf]
      %v2165 = vld [vmem:[%s2 + $0x44] sm:$0xf]
      %v2166 = vld [vmem:[%s2 + $0x48] sm:$0xf]
      %v2167 = vld [vmem:[%s2 + $0x4c] sm:$0xf]
      %v2168 = vld [vmem:[%s2 + $0x50] sm:$0xf]
      %v2169 = vld [vmem:[%s2 + $0x54] sm:$0xf]
      %v2170 = vld [vmem:[%s2 + $0x58] sm:$0xf]
      %v2171 = vld [vmem:[%s2 + $0x5c] sm:$0xf]
      %v2172 = vld [vmem:[%s2 + $0x60] sm:$0xf]
      %v2173 = vld [vmem:[%s2 + $0x64] sm:$0xf]
      %v2174 = vld [vmem:[%s2 + $0x68] sm:$0xf]
      %v2175 = vld [vmem:[%s2 + $0x6c] sm:$0xf]
      %v2176 = vld [vmem:[%s2 + $0x70] sm:$0xf]
      %v2177 = vld [vmem:[%s2 + $0x74] sm:$0xf]
      %v2178 = vld [vmem:[%s2 + $0x78] sm:$0xf]
      %v2179 = vld [vmem:[%s2 + $0x7c] sm:$0xf]
      %v2180 = vld [vmem:[%s2 + $0x80] sm:$0xf]
      %v2181 = vld [vmem:[%s2 + $0x84] sm:$0xf]
      %v2182 = vld [vmem:[%s2 + $0x88] sm:$0xf]
      %v2183 = vld [vmem:[%s2 + $0x8c] sm:$0xf]
      %v2184 = vld [vmem:[%s2 + $0x90] sm:$0xf]
      %v2185 = vld [vmem:[%s2 + $0x94] sm:$0xf]
      %v2186 = vld [vmem:[%s2 + $0x98] sm:$0xf]
      %v2187 = vld [vmem:[%s2 + $0x9c] sm:$0xf]
      %v2188 = vld [vmem:[%s2 + $0xa0] sm:$0xf]
      %v2189 = vld [vmem:[%s2 + $0xa4] sm:$0xf]
      %v2190 = vld [vmem:[%s2 + $0xa8] sm:$0xf]
      %v2191 = vld [vmem:[%s2 + $0xac] sm:$0xf]
      %v2192 = vld [vmem:[%s2 + $0xb0] sm:$0xf]
      %v2193 = vld [vmem:[%s2 + $0xb4] sm:$0xf]
      %v2194 = vld [vmem:[%s2 + $0xb8] sm:$0xf]
      %v2195 = vld [vmem:[%s2 + $0xbc] sm:$0xf]
      %v2196 = vld [vmem:[%s2 + $0xc0] sm:$0xf]
      %v2197 = vld [vmem:[%s2 + $0xc4] sm:$0xf]
      %v2198 = vld [vmem:[%s2 + $0xc8] sm:$0xf]
      %v2199 = vld [vmem:[%s2 + $0xcc] sm:$0xf]
      %v2200 = vld [vmem:[%s2 + $0xd0] sm:$0xf]
      %v2201 = vld [vmem:[%s2 + $0xd4] sm:$0xf]
      %2202 = vxpose.xlu0.c.b16.start [1/8] %v2094, 128
      %2203 = vxpose.xlu0.c.b16.cont [2/8] %v2095, 128
      %2204 = vxpose.xlu0.c.b16.cont [3/8] %v2096, 128
      %2205 = vxpose.xlu0.c.b16.cont [4/8] %v2097, 128
      %2206 = vxpose.xlu0.c.b16.cont [5/8] %v2098, 128
      %2207 = vxpose.xlu0.c.b16.cont [6/8] %v2099, 128
      %2208 = vxpose.xlu0.c.b16.cont [7/8] %v2100, 128
      %2209 = vxpose.xlu0.c.b16.end [8/8] %v2101, 128
      %v2210 = vpop.trf.xlu0
      %v2211 = vpop.trf.xlu0
      %v2212 = vpop.trf.xlu0
      %v2213 = vpop.trf.xlu0
      %v2214 = vpop.trf.xlu0
      %v2215 = vpop.trf.xlu0
      %v2216 = vpop.trf.xlu0
      %v2217 = vpop.trf.xlu0
      %2218 = vxpose.xlu0.c.b16.start [1/8] %v2102, 128
      %2219 = vxpose.xlu0.c.b16.cont [2/8] %v2094, 128
      %2220 = vxpose.xlu0.c.b16.cont [3/8] %v2095, 128
      %2221 = vxpose.xlu0.c.b16.cont [4/8] %v2096, 128
      %2222 = vxpose.xlu0.c.b16.cont [5/8] %v2097, 128
      %2223 = vxpose.xlu0.c.b16.cont [6/8] %v2098, 128
      %2224 = vxpose.xlu0.c.b16.cont [7/8] %v2099, 128
      %2225 = vxpose.xlu0.c.b16.end [8/8] %v2100, 128
      %v2226 = vpop.trf.xlu0
      %v2227 = vpop.trf.xlu0
      %v2228 = vpop.trf.xlu0
      %v2229 = vpop.trf.xlu0
      %v2230 = vpop.trf.xlu0
      %v2231 = vpop.trf.xlu0
      %v2232 = vpop.trf.xlu0
      %v2233 = vpop.trf.xlu0
      %2234 = vxpose.xlu0.c.b16.start [1/8] %v2101, 128
      %2235 = vxpose.xlu0.c.b16.cont [2/8] %v2102, 128
      %2236 = vxpose.xlu0.c.b16.cont [3/8] %v2139, 128
      %2237 = vxpose.xlu0.c.b16.cont [4/8] %v2140, 128
      %2238 = vxpose.xlu0.c.b16.cont [5/8] %v2141, 128
      %2239 = vxpose.xlu0.c.b16.cont [6/8] %v2142, 128
      %2240 = vxpose.xlu0.c.b16.cont [7/8] %v2143, 128
      %2241 = vxpose.xlu0.c.b16.end [8/8] %v2144, 128
      %v2242 = vpop.trf.xlu0
      %v2243 = vpop.trf.xlu0
      %v2244 = vpop.trf.xlu0
      %v2245 = vpop.trf.xlu0
      %v2246 = vpop.trf.xlu0
      %v2247 = vpop.trf.xlu0
      %v2248 = vpop.trf.xlu0
      %v2249 = vpop.trf.xlu0
      %2250 = vxpose.xlu0.c.b16.start [1/8] %v2145, 128
      %2251 = vxpose.xlu0.c.b16.cont [2/8] %v2146, 128
      %2252 = vxpose.xlu0.c.b16.cont [3/8] %v2147, 128
      %2253 = vxpose.xlu0.c.b16.cont [4/8] 0, 128
      %2254 = vxpose.xlu0.c.b16.cont [5/8] 0, 128
      %2255 = vxpose.xlu0.c.b16.cont [6/8] 0, 128
      %2256 = vxpose.xlu0.c.b16.cont [7/8] 0, 128
      %2257 = vxpose.xlu0.c.b16.end [8/8] 0, 128
      %v2258 = vpop.trf.xlu0
      %v2259 = vpop.trf.xlu0
      %v2260 = vpop.trf.xlu0
      %v2261 = vpop.trf.xlu0
      %v2262 = vpop.trf.xlu0
      %v2263 = vpop.trf.xlu0
      %v2264 = vpop.trf.xlu0
      %v2265 = vpop.trf.xlu0
      %v2320 = vunpack.c.l.b16 %v2148
      %v2321 = vunpack.c.l.b16 %v2149
      %v2322 = vunpack.c.l.b16 %v2150
      %v2323 = vunpack.c.l.b16 %v2151
      %v2324 = vunpack.c.l.b16 %v2152
      %v2325 = vunpack.c.l.b16 %v2153
      %v2326 = vunpack.c.l.b16 %v2154
      %v2327 = vunpack.c.l.b16 %v2155
      %v2328 = vunpack.c.l.b16 %v2156
      %v2329 = vunpack.c.l.b16 %v2157
      %v2330 = vunpack.c.l.b16 %v2158
      %v2331 = vunpack.c.l.b16 %v2159
      %v2332 = vunpack.c.l.b16 %v2160
      %v2333 = vunpack.c.l.b16 %v2161
      %v2334 = vunpack.c.l.b16 %v2162
      %v2335 = vunpack.c.l.b16 %v2163
      %v2336 = vunpack.c.l.b16 %v2164
      %v2337 = vunpack.c.l.b16 %v2165
      %v2338 = vunpack.c.l.b16 %v2166
      %v2339 = vunpack.c.l.b16 %v2167
      %v2340 = vunpack.c.l.b16 %v2168
      %v2341 = vunpack.c.l.b16 %v2169
      %v2342 = vunpack.c.l.b16 %v2170
      %v2343 = vunpack.c.l.b16 %v2171
      %v2344 = vunpack.c.l.b16 %v2172
      %v2345 = vunpack.c.l.b16 %v2173
      %v2346 = vunpack.c.l.b16 %v2174
      %v2347 = vunpack.c.l.b16 %v2175
      %v2348 = vunpack.c.l.b16 %v2176
      %v2349 = vunpack.c.l.b16 %v2177
      %v2350 = vunpack.c.l.b16 %v2178
      %v2351 = vunpack.c.l.b16 %v2179
      %v2352 = vunpack.c.l.b16 %v2180
      %v2353 = vunpack.c.l.b16 %v2181
      %v2354 = vunpack.c.l.b16 %v2182
      %v2355 = vunpack.c.l.b16 %v2183
      %v2356 = vunpack.c.l.b16 %v2184
      %v2357 = vunpack.c.l.b16 %v2185
      %v2358 = vunpack.c.l.b16 %v2186
      %v2359 = vunpack.c.l.b16 %v2187
      %v2360 = vunpack.c.l.b16 %v2188
      %v2361 = vunpack.c.l.b16 %v2189
      %v2362 = vunpack.c.l.b16 %v2190
      %v2363 = vunpack.c.l.b16 %v2191
      %v2364 = vunpack.c.l.b16 %v2192
      %v2365 = vunpack.c.l.b16 %v2193
      %v2366 = vunpack.c.l.b16 %v2194
      %v2367 = vunpack.c.l.b16 %v2195
      %v2368 = vunpack.c.l.b16 %v2196
      %v2369 = vunpack.c.l.b16 %v2197
      %v2370 = vunpack.c.l.b16 %v2198
      %v2371 = vunpack.c.l.b16 %v2199
      %v2372 = vunpack.c.l.b16 %v2200
      %v2373 = vunpack.c.l.b16 %v2201
      %v2374 = vpack.c.b16 %v2321, %v2320
      %v2375 = vpack.c.b16 %v2323, %v2322
      %v2376 = vpack.c.b16 %v2325, %v2324
      %v2377 = vpack.c.b16 %v2327, %v2326
      %v2378 = vpack.c.b16 %v2329, %v2328
      %v2379 = vpack.c.b16 %v2331, %v2330
      %v2380 = vpack.c.b16 %v2333, %v2332
      %v2381 = vpack.c.b16 %v2335, %v2334
      %v2382 = vpack.c.b16 %v2337, %v2336
      %v2383 = vpack.c.b16 %v2339, %v2338
      %v2384 = vpack.c.b16 %v2341, %v2340
      %v2385 = vpack.c.b16 %v2343, %v2342
      %v2386 = vpack.c.b16 %v2345, %v2344
      %v2387 = vpack.c.b16 %v2347, %v2346
      %v2388 = vpack.c.b16 %v2349, %v2348
      %v2389 = vpack.c.b16 %v2351, %v2350
      %v2390 = vpack.c.b16 %v2353, %v2352
      %v2391 = vpack.c.b16 %v2355, %v2354
      %v2392 = vpack.c.b16 %v2357, %v2356
      %v2393 = vpack.c.b16 %v2359, %v2358
      %v2394 = vpack.c.b16 %v2361, %v2360
      %v2395 = vpack.c.b16 %v2363, %v2362
      %v2396 = vpack.c.b16 %v2365, %v2364
      %v2397 = vpack.c.b16 %v2367, %v2366
      %v2398 = vpack.c.b16 %v2369, %v2368
      %v2399 = vpack.c.b16 %v2371, %v2370
      %v2400 = vpack.c.b16 %v2373, %v2372
      %vm2428 = vcmask 392192
      %v2430 = vsel %vm2428, %v2258, 0
      %2432 = vmatprep.subr.bf16.mxu0 0
      %2433 = vmatpush1.bf16.msra.mxu0 %v2381
      %2434 = vmatprep.subr.bf16.mxu0 0
      %2435 = vmatpush1.bf16.msra.mxu0 %v2380
      %2436 = vmatprep.subr.bf16.mxu0 0
      %2437 = vmatpush1.bf16.msra.mxu0 %v2379
      %2438 = vmatprep.subr.bf16.mxu0 0
      %2439 = vmatpush1.bf16.msra.mxu0 %v2378
      %2440 = vmatprep.subr.bf16.mxu0 0
      %2441 = vmatpush1.bf16.msra.mxu0 %v2377
      %2442 = vmatprep.subr.bf16.mxu0 0
      %2443 = vmatpush1.bf16.msra.mxu0 %v2376
      %2444 = vmatprep.subr.bf16.mxu0 0
      %2445 = vmatpush1.bf16.msra.mxu0 %v2375
      %2446 = vmatprep.subr.bf16.mxu0 0
      %2447 = vmatpush1.bf16.msra.mxu0 %v2374
      %2448 = vmatprep.subr.bf16.mxu0 0
      %2449 = vmatpush2.bf16.msra.mxu0 %v2389
      %2450 = vmatprep.subr.bf16.mxu0 0
      %2451 = vmatpush2.bf16.msra.mxu0 %v2388
      %2452 = vmatprep.subr.bf16.mxu0 0
      %2453 = vmatpush2.bf16.msra.mxu0 %v2387
      %2454 = vmatprep.subr.bf16.mxu0 0
      %2455 = vmatpush2.bf16.msra.mxu0 %v2386
      %2456 = vmatprep.subr.bf16.mxu0 0
      %2457 = vmatpush2.bf16.msra.mxu0 %v2385
      %2458 = vmatprep.subr.bf16.mxu0 0
      %2459 = vmatpush2.bf16.msra.mxu0 %v2384
      %2460 = vmatprep.subr.bf16.mxu0 0
      %2461 = vmatpush2.bf16.msra.mxu0 %v2383
      %2462 = vmatprep.subr.bf16.mxu0 0
      %2463 = vmatpush2.bf16.msra.mxu0 %v2382
      %2464 = vmatprep.mubr.bf16.mxu0 %v2226
      %2465 = vmatmul.mubr.bf16.gmra.mxu0 %v2210
      %v2466 = vpop.f32.mrf.mxu0
      %v2467 = vadd.f32 0.0, %v2466
      %v2468 = vpop.f32.mrf.mxu0
      %v2469 = vpop.f32.mrf.mxu0
      %v2470 = vpop.f32.mrf.mxu0
      %2471 = vdwg.mxu0
      %2472 = vmatprep.subr.bf16.mxu0 0
      %2473 = vmatpush1.bf16.msra.mxu0 %v2397
      %2474 = vmatprep.subr.bf16.mxu0 0
      %2475 = vmatpush1.bf16.msra.mxu0 %v2396
      %2476 = vmatprep.subr.bf16.mxu0 0
      %2477 = vmatpush1.bf16.msra.mxu0 %v2395
      %2478 = vmatprep.subr.bf16.mxu0 0
      %2479 = vmatpush1.bf16.msra.mxu0 %v2394
      %2480 = vmatprep.subr.bf16.mxu0 0
      %2481 = vmatpush1.bf16.msra.mxu0 %v2393
      %2482 = vmatprep.subr.bf16.mxu0 0
      %2483 = vmatpush1.bf16.msra.mxu0 %v2392
      %2484 = vmatprep.subr.bf16.mxu0 0
      %2485 = vmatpush1.bf16.msra.mxu0 %v2391
      %2486 = vmatprep.subr.bf16.mxu0 0
      %2487 = vmatpush1.bf16.msra.mxu0 %v2390
      %2488 = vmatprep.subr.bf16.mxu0 0
      %2489 = vmatpush2.bf16.msra.mxu0 0
      %2490 = vmatprep.subr.bf16.mxu0 0
      %2491 = vmatpush2.bf16.msra.mxu0 0
      %2492 = vmatprep.subr.bf16.mxu0 0
      %2493 = vmatpush2.bf16.msra.mxu0 0
      %2494 = vmatprep.subr.bf16.mxu0 0
      %2495 = vmatpush2.bf16.msra.mxu0 0
      %2496 = vmatprep.subr.bf16.mxu0 0
      %2497 = vmatpush2.bf16.msra.mxu0 0
      %2498 = vmatprep.subr.bf16.mxu0 0
      %2499 = vmatpush2.bf16.msra.mxu0 %v2400
      %2500 = vmatprep.subr.bf16.mxu0 0
      %2501 = vmatpush2.bf16.msra.mxu0 %v2399
      %2502 = vmatprep.subr.bf16.mxu0 0
      %2503 = vmatpush2.bf16.msra.mxu0 %v2398
      %2504 = vmatprep.mubr.bf16.mxu0 %v2430
      %2505 = vmatmul.mubr.bf16.gmra.mxu0 %v2242
      %v2506 = vpop.f32.mrf.mxu0
      %v2507 = vadd.f32 %v2467, %v2506
      %v2508 = vpop.f32.mrf.mxu0
      %v2509 = vpop.f32.mrf.mxu0
      %v2510 = vpop.f32.mrf.mxu0
      %2511 = vdwg.mxu0
      %v2513 = vrot.slane %v2507, 7
      %2514 = vrot.lane.b32.xlu0 %v2513, 64
      %v2515 = vpop.permute.xlu0 %2514
      %v2517 = vsel %vm2091, 0.0, %v2515
      %v2518 = vadd.f32 %v2507, %v2517
      %v2519 = vadd.f32 %v2515, 0.0
      %vm2520 = vcmask 523264
      %2521 = vst.msk [vmem:[%s190] sm:$0xff] %vm2520, %v2518
      %vm2522 = vcmask 516096
      %2523 = vst.msk [vmem:[%s190 + $0x8] sm:$0x1] %vm2522, %v2519
      %p2524 = scmp.lt.s32.totalorder %s14, 1
      %s2525 = scalar_select %p2524, %s14, 1
      %s2526 = smul.addr %s2525, 2
      %s2527 = smul.addr %s2526, 8
      %s2528 = scalar_lea.vmem %s3, %s2527
      // Predicated region
      $region33: #{tpu_custom_call.1} parent=31 // pred_check
        %p2529 = pneg %p105
      $region34: #{tpu_custom_call.1} parent=31 // pred_check_branch
        %2531 = sbr.rel (%p2529) target = $region36
      $region35: #{tpu_custom_call.1} parent=31 // pred_region
        _
      $region36: #{tpu_custom_call.1} parent=31 // pred_fallthru
        _
    $region32: #{tpu_custom_call.1} parent=5 // pred_fallthru
      _
    %p2532 = scmp.le.s32.totalorder 2, %s9
    // Predicated region
    $region37: #{tpu_custom_call.1} parent=5 // pred_check
      %p2533 = pneg %p2532
    $region38: #{tpu_custom_call.1} parent=5 // pred_check_branch
      %2535 = sbr.rel (%p2533) target = $region40
    $region39: #{tpu_custom_call.1} parent=5 // pred_region
      %s2536 = ssub.s32 %s9, 2
      // Predicated region
      $region41: #{tpu_custom_call.1} parent=39 // pred_check
        %p2537 = pneg %p111
      $region42: #{tpu_custom_call.1} parent=39 // pred_check_branch
        %2539 = sbr.rel (%p2537) target = $region44
      $region43: #{tpu_custom_call.1} parent=39 // pred_region
        %p2540 = scmp.lt.s32.totalorder %s15, 1
        %s2541 = scalar_select %p2540, %s15, 1
        %s2542 = smul.addr %s2541, 2
        %s2543 = smul.addr %s2542, 8
        %s2544 = scalar_lea.vmem %s3, %s2543
      $region44: #{tpu_custom_call.1} parent=39 // pred_fallthru
        _
    $region40: #{tpu_custom_call.1} parent=5 // pred_fallthru
      _
  $region6: #{tpu_custom_call.1} parent=0 // loop_footer
    %s13 = sadd.s32 1, %s9
  $region7: #{tpu_custom_call.1} parent=0 // loop_footer_branch
    %8 = sbr.rel target = $region3
  $region8: #{tpu_custom_call.1} parent=0 // loop_exit
    _

</llo_original>
